<compile_context>
chip_gen: v7x
topology: tpu7x:2x2x1
jax: 0.10.0
libtpu: 0.0.40
codegen_flags: <defaults>
</compile_context>

<pallas_src>
import functools

import jax
import jax.numpy as jnp
from jax import lax
from jax.experimental import pallas as pl
from jax.experimental.pallas import tpu as pltpu

INPUT_SIZE = 132
IN_PAD = 256                # feature dim padded to a lane multiple for the projection matmul
HIDDEN = 64
GATES = 4 * HIDDEN          # 256 (one layer, gate order [i, f, o, g])
WIDE = 2 * GATES            # 512 (both layers, per-gate interleaved: [L0_i|L1_i|L0_f|L1_f|...])
FC_PAD = 128                # lane-dense FC output (real logit in column 0)
PROJ_ROWS = 64              # rows per input-projection MXU tile

DEFAULT_MAX_TCHUNK = 512
VMEM_SLAB_BUDGET = 12 * 1024 * 1024   # bytes for the per-chunk x + pre slabs


def _sigmoid(x):
    # One EUP tanh instead of exp + reciprocal: shortens the serial transcendental chain.
    return jnp.tanh(x * 0.5) * 0.5 + 0.5


def _lstm_kernel(x_ref,      # (tchunk*b_pad, IN_PAD) f32, time-major input chunk
                 wxw_ref,    # (IN_PAD, 512) bf16: [x->L0 gates | zeros], gate-interleaved
                 bw_ref,     # (1, 512)  f32:  [b0 | b1] gate-interleaved
                 wbig_ref,   # (128, 512) bf16: rows 0:64 act on h0, rows 64:128 act on h1
                 w1_ref,     # (128, 256) bf16: [wih1; whh1] (layer-1 only, drain step)
                 b1_ref,     # (1, 256)  f32
                 wfc_ref,    # (64, 128) f32 (column 0 real)
                 bfc_ref,    # (1, 128)  f32
                 out_ref,    # (b_pad, 128) f32
                 pre_s,      # VMEM (tchunk*b_pad, 512) f32
                 h_s,        # VMEM (b_pad, 128) f32  packed [h0 | h1]
                 c_s,        # VMEM (b_pad, 128) f32  packed [c0 | c1]
                 *, tchunk, b_pad, t_real, masked, unroll):
    t = pl.program_id(0)
    last = pl.num_programs(0) - 1
    n_rows = tchunk * b_pad

    # ---- chunk-level layer-0 input projection (tiled, off the recurrent critical path) ----
    @pl.loop(0, n_rows // PROJ_ROWS)
    def _(pi):
        r0 = pl.multiple_of(pi * PROJ_ROWS, PROJ_ROWS)
        xi = x_ref[pl.ds(r0, PROJ_ROWS), :].astype(jnp.bfloat16)
        pre_s[pl.ds(r0, PROJ_ROWS), :] = (
            jnp.dot(xi, wxw_ref[...], preferred_element_type=jnp.float32) + bw_ref[...])

    @pl.when(t == 0)
    def _():
        h_s[...] = jnp.zeros_like(h_s)
        c_s[...] = jnp.zeros_like(c_s)
        # Wavefront start-up: at global step 0 layer-1 has no valid input yet. Force its
        # input-gate pre-activation to -inf so c1/h1 stay exactly zero on that step.
        row0 = pre_s[:b_pad, :]
        lane = lax.broadcasted_iota(jnp.int32, (b_pad, WIDE), 1)
        i1_cols = jnp.logical_and(lane >= HIDDEN, lane < 2 * HIDDEN)
        pre_s[:b_pad, :] = jnp.where(i1_cols, jnp.float32(-1e30), row0)

    # ---- staggered recurrence: one fused bf16 matmul per timestep, packed cell update ----
    def run_chunk(do_mask):
        def step_fn(s, carry):
            h, c = carry                                          # (b_pad, 128) f32
            r0 = pl.multiple_of(s * b_pad, 8)
            pre = pre_s[pl.ds(r0, b_pad), :]                      # (b_pad, 512) f32
            gates = pre + jnp.dot(h.astype(jnp.bfloat16), wbig_ref[...],
                                  preferred_element_type=jnp.float32)
            sg = _sigmoid(gates[:, :6 * HIDDEN])                  # [i|f|o], both layers packed
            i_p = sg[:, 0:2 * HIDDEN]
            f_p = sg[:, 2 * HIDDEN:4 * HIDDEN]
            o_p = sg[:, 4 * HIDDEN:6 * HIDDEN]
            g_p = jnp.tanh(gates[:, 6 * HIDDEN:])
            c_n = f_p * c + i_p * g_p
            h_n = o_p * jnp.tanh(c_n)
            if do_mask:                                           # static: tail chunk only
                valid = (t * tchunk + s) < t_real
                h_n = jnp.where(valid, h_n, h)
                c_n = jnp.where(valid, c_n, c)
            return h_n, c_n

        h_n, c_n = lax.fori_loop(0, tchunk, step_fn, (h_s[...], c_s[...]),
                                 unroll=unroll)
        h_s[...] = h_n
        c_s[...] = c_n

    if masked:
        # Only the tail chunk pays for the validity selects.
        @pl.when(t != last)
        def _():
            run_chunk(False)

        @pl.when(t == last)
        def _():
            run_chunk(True)
    else:
        run_chunk(False)

    # ---- drain + head: layer-1 still owes its final timestep, then FC + sigmoid ----
    @pl.when(t == last)
    def _():
        h_pk = h_s[...]                                           # [h0[T-1] | h1[T-2]]
        c1_prev = c_s[...][:, HIDDEN:]
        g1 = (jnp.dot(h_pk.astype(jnp.bfloat16), w1_ref[...],
                      preferred_element_type=jnp.float32) + b1_ref[...])
        sg = _sigmoid(g1[:, :3 * HIDDEN])
        i1 = sg[:, 0:HIDDEN]
        f1 = sg[:, HIDDEN:2 * HIDDEN]
        o1 = sg[:, 2 * HIDDEN:3 * HIDDEN]
        gg = jnp.tanh(g1[:, 3 * HIDDEN:])
        c1 = f1 * c1_prev + i1 * gg
        h1 = o1 * jnp.tanh(c1)
        logit = (jnp.dot(h1, wfc_ref[...], preferred_element_type=jnp.float32)
                 + bfc_ref[...])
        out_ref[...] = _sigmoid(logit)                            # lane-dense (b_pad, 128) store


def _gate_perm():
    # PyTorch gate order along the 4H axis is [i, f, g, o]; reorder to [i, f, o, g].
    h = HIDDEN
    return jnp.concatenate([jnp.arange(0, h), jnp.arange(h, 2 * h),
                            jnp.arange(3 * h, 4 * h), jnp.arange(2 * h, 3 * h)])


def _interleave_cols(l0, l1):
    """Interleave per-gate 64-wide column blocks of two (r, 256) matrices -> (r, 512)."""
    r = l0.shape[0]
    return jnp.concatenate([l0.reshape(r, 4, HIDDEN), l1.reshape(r, 4, HIDDEN)],
                           axis=-1).reshape(r, WIDE)


def _round_up(v, m):
    return -(-v // m) * m


@functools.partial(jax.jit, static_argnames=("max_tchunk", "unroll"))
def fall_lstm_forward(x, params, *, max_tchunk=DEFAULT_MAX_TCHUNK, unroll=8):
    """x: (B, T, 132) float32 (batch_first, matching the PyTorch module)."""
    B, T, F = x.shape
    assert F == INPUT_SIZE
    f32, bf16 = jnp.float32, jnp.bfloat16
    perm = _gate_perm()

    # ---- weight prep: permute gates to [i,f,o,g], build interleaved wide layouts ----
    wih0 = params["wih0"].T[:, perm]                          # (132, 256)
    whh0 = params["whh0"].T[:, perm]                          # (64, 256)
    wih1 = params["wih1"].T[:, perm]                          # (64, 256)
    whh1 = params["whh1"].T[:, perm]                          # (64, 256)
    b0 = (params["bih0"] + params["bhh0"])[perm]
    b1 = (params["bih1"] + params["bhh1"])[perm]

    wx = _interleave_cols(wih0, jnp.zeros((INPUT_SIZE, GATES), f32))          # (132, 512)
    wx_wide = jnp.zeros((IN_PAD, WIDE), f32).at[:INPUT_SIZE, :].set(wx).astype(bf16)
    b_wide = _interleave_cols(b0[None, :], b1[None, :]).astype(f32)           # (1, 512)
    w_big = jnp.concatenate(
        [_interleave_cols(whh0, wih1),
         _interleave_cols(jnp.zeros((HIDDEN, GATES), f32), whh1)], axis=0).astype(bf16)
    w1 = jnp.concatenate([wih1, whh1], axis=0).astype(bf16)                   # (128, 256)
    b1r = b1.reshape(1, GATES).astype(f32)
    wfc = jnp.zeros((HIDDEN, FC_PAD), f32).at[:, 0].set(params["wfc"][0])
    bfc = jnp.zeros((1, FC_PAD), f32).at[0, 0].set(params["bfc"][0])

    # ---- batch / time padding & VMEM-budget-derived time chunking ----
    b_pad = max(8, _round_up(B, 8))
    per_step_bytes = b_pad * (WIDE * 4 + 2 * IN_PAD * 4)      # pre slab + double-buffered x
    cap = max(8, (VMEM_SLAB_BUDGET // per_step_bytes) // 8 * 8)
    tchunk = max(8, min(_round_up(T, 8), _round_up(max(int(max_tchunk), 1), 8), cap))
    num_chunks = -(-T // tchunk)
    t_pad = num_chunks * tchunk
    masked = (t_pad != T)

    xp = jnp.pad(x.astype(f32),
                 ((0, b_pad - B), (0, t_pad - T), (0, IN_PAD - INPUT_SIZE)))
    x_flat = xp.transpose(1, 0, 2).reshape(t_pad * b_pad, IN_PAD)   # time-major, flat rows

    kernel = functools.partial(_lstm_kernel, tchunk=tchunk, b_pad=b_pad, t_real=T,
                               masked=masked, unroll=min(int(unroll), tchunk))

    const = lambda a: pl.BlockSpec(a.shape, lambda t: (0,) * a.ndim)
    slab_bytes = tchunk * per_step_bytes
    vmem_limit = int(min(100 * 2 ** 20, max(32 * 2 ** 20, 2 * slab_bytes)))

    out = pl.pallas_call(
        kernel,
        out_shape=jax.ShapeDtypeStruct((b_pad, FC_PAD), f32),
        grid_spec=pltpu.PrefetchScalarGridSpec(
            num_scalar_prefetch=0,
            grid=(num_chunks,),
            in_specs=[
                pl.BlockSpec((tchunk * b_pad, IN_PAD), lambda t: (t, 0)),
                const(wx_wide), const(b_wide), const(w_big),
                const(w1), const(b1r), const(wfc), const(bfc),
            ],
            out_specs=pl.BlockSpec((b_pad, FC_PAD), lambda t: (0, 0)),
            scratch_shapes=[
                pltpu.VMEM((tchunk * b_pad, WIDE), f32),      # pre-activations for the chunk
                pltpu.VMEM((b_pad, 2 * HIDDEN), f32),         # packed [h0 | h1]
                pltpu.VMEM((b_pad, 2 * HIDDEN), f32),         # packed [c0 | c1]
            ],
        ),
        compiler_params=pltpu.CompilerParams(
            dimension_semantics=("arbitrary",),
            vmem_limit_bytes=vmem_limit),
    )(x_flat, wx_wide, b_wide, w_big, w1, b1r, wfc, bfc)

    return out[:B, :1]


def init_params(key):
    """Deterministic init with PyTorch-style shapes (uniform +/- 1/sqrt(hidden))."""
    k = 1.0 / jnp.sqrt(jnp.float32(HIDDEN))
    keys = jax.random.split(key, 10)
    u = lambda kk, shape: jax.random.uniform(kk, shape, jnp.float32, -k, k)
    return {
        "wih0": u(keys[0], (4 * HIDDEN, INPUT_SIZE)),
        "whh0": u(keys[1], (4 * HIDDEN, HIDDEN)),
        "bih0": u(keys[2], (4 * HIDDEN,)),
        "bhh0": u(keys[3], (4 * HIDDEN,)),
        "wih1": u(keys[4], (4 * HIDDEN, HIDDEN)),
        "whh1": u(keys[5], (4 * HIDDEN, HIDDEN)),
        "bih1": u(keys[6], (4 * HIDDEN,)),
        "bhh1": u(keys[7], (4 * HIDDEN,)),
        "wfc": u(keys[8], (1, HIDDEN)),
        "bfc": u(keys[9], (1,)),
    }


def reference_forward(x, p):
    """Pure-JAX f32 reference mirroring torch.nn.LSTM (2 layers) + Linear + Sigmoid."""
    B, T, _ = x.shape

    def layer(seq, wih, whh, bih, bhh):
        h = jnp.zeros((B, HIDDEN), jnp.float32)
        c = jnp.zeros((B, HIDDEN), jnp.float32)
        outs = []
        for t in range(T):
            gates = seq[:, t, :] @ wih.T + h @ whh.T + bih + bhh
            i = jax.nn.sigmoid(gates[:, 0 * HIDDEN:1 * HIDDEN])
            f = jax.nn.sigmoid(gates[:, 1 * HIDDEN:2 * HIDDEN])
            g = jnp.tanh(gates[:, 2 * HIDDEN:3 * HIDDEN])
            o = jax.nn.sigmoid(gates[:, 3 * HIDDEN:4 * HIDDEN])
            c = f * c + i * g
            h = o * jnp.tanh(c)
            outs.append(h)
        return jnp.stack(outs, axis=1)

    h0_seq = layer(x, p["wih0"], p["whh0"], p["bih0"], p["bhh0"])
    h1_seq = layer(h0_seq, p["wih1"], p["whh1"], p["bih1"], p["bhh1"])
    logit = h1_seq[:, -1, :] @ p["wfc"].T + p["bfc"]
    return jax.nn.sigmoid(logit)


if __name__ == "__main__":
    key = jax.random.PRNGKey(0)
    kx, kp, kx2, kx3 = jax.random.split(key, 4)
    params = init_params(kp)

    # bf16 MXU operands -> loosened tolerances vs. the f32 reference.
    RTOL, ATOL = 2e-2, 2e-2

    # Primary case (matches the original test shapes).
    B, T = 2, 8
    x = jax.random.normal(kx, (B, T, INPUT_SIZE), jnp.float32)
    out = jax.block_until_ready(fall_lstm_forward(x, params))
    ref = reference_forward(x, params)
    assert out.shape == (B, 1), out.shape
    assert jnp.allclose(out, ref, rtol=RTOL, atol=ATOL), (out, ref)

    # Odd batch / T not a multiple of 8 (batch padding + single masked chunk).
    x2 = jax.random.normal(kx2, (3, 13, INPUT_SIZE), jnp.float32)
    out2 = jax.block_until_ready(fall_lstm_forward(x2, params))
    ref2 = reference_forward(x2, params)
    assert out2.shape == (3, 1), out2.shape
    assert jnp.allclose(out2, ref2, rtol=RTOL, atol=ATOL), (out2, ref2)

    # Multi-chunk grid with ragged tail (exercises chunking + tail-only masking + drain).
    x3 = jax.random.normal(kx3, (2, 27, INPUT_SIZE), jnp.float32)
    out3 = jax.block_until_ready(fall_lstm_forward(x3, params, max_tchunk=8))
    ref3 = reference_forward(x3, params)
    assert out3.shape == (2, 1), out3.shape
    assert jnp.allclose(out3, ref3, rtol=RTOL, atol=ATOL), (out3, ref3)

    print("KERNEL_OK")
</pallas_src>

<mosaic_0001>
module attributes {stable_mosaic.version = 11 : i64} {
  func.func @_lstm_kernel(%arg0: i32, %arg1: memref<64x256xf32, #tpu.memory_space<vmem>>, %arg2: memref<256x512xbf16, #tpu.memory_space<vmem>>, %arg3: memref<1x512xf32, #tpu.memory_space<vmem>>, %arg4: memref<128x512xbf16, #tpu.memory_space<vmem>>, %arg5: memref<128x256xbf16, #tpu.memory_space<vmem>>, %arg6: memref<1x256xf32, #tpu.memory_space<vmem>>, %arg7: memref<64x128xf32, #tpu.memory_space<vmem>>, %arg8: memref<1x128xf32, #tpu.memory_space<vmem>>, %arg9: memref<8x128xf32, #tpu.memory_space<vmem>>, %arg10: memref<64x512xf32, #tpu.memory_space<vmem>>, %arg11: memref<8x128xf32, #tpu.memory_space<vmem>>, %arg12: memref<8x128xf32, #tpu.memory_space<vmem>>) attributes {dimension_semantics = [#tpu.dimension_semantics<arbitrary>], iteration_bounds = array<i64: 1>, scalar_prefetch = 0 : i64, scratch_operands = 3 : i64, tpu.core_type = #tpu.core_type<tc>, window_params = [{transform_indices = @transform_0, window_bounds = array<i64: 64, 256>}, {pipeline_mode = #tpu.pipeline_mode<synchronous>, transform_indices = @transform_1, window_bounds = array<i64: 256, 512>}, {pipeline_mode = #tpu.pipeline_mode<synchronous>, transform_indices = @transform_2, window_bounds = array<i64: 1, 512>}, {pipeline_mode = #tpu.pipeline_mode<synchronous>, transform_indices = @transform_3, window_bounds = array<i64: 128, 512>}, {pipeline_mode = #tpu.pipeline_mode<synchronous>, transform_indices = @transform_4, window_bounds = array<i64: 128, 256>}, {pipeline_mode = #tpu.pipeline_mode<synchronous>, transform_indices = @transform_5, window_bounds = array<i64: 1, 256>}, {pipeline_mode = #tpu.pipeline_mode<synchronous>, transform_indices = @transform_6, window_bounds = array<i64: 64, 128>}, {pipeline_mode = #tpu.pipeline_mode<synchronous>, transform_indices = @transform_7, window_bounds = array<i64: 1, 128>}, {pipeline_mode = #tpu.pipeline_mode<synchronous>, transform_indices = @transform_8, window_bounds = array<i64: 8, 128>}]} {
    %c0_i32 = arith.constant 0 : i32
    %c1_i32 = arith.constant 1 : i32
    %0 = arith.muli %c0_i32, %c1_i32 : i32
    %c0_i32_0 = arith.constant 0 : i32
    %1 = arith.addi %c0_i32_0, %0 : i32
    %c64_i32 = arith.constant 64 : i32
    %2 = arith.muli %1, %c64_i32 : i32
    %3 = tpu.assume_multiple %2, 64 : i32
    %4 = arith.index_cast %3 : i32 to index
    %c0 = arith.constant 0 : index
    %5 = vector.load %arg1[%4, %c0] : memref<64x256xf32, #tpu.memory_space<vmem>>, vector<64x256xf32>
    %6 = arith.truncf %5 : vector<64x256xf32> to vector<64x256xbf16>
    %c0_1 = arith.constant 0 : index
    %c0_2 = arith.constant 0 : index
    %7 = vector.load %arg2[%c0_1, %c0_2] : memref<256x512xbf16, #tpu.memory_space<vmem>>, vector<256x512xbf16>
    %cst = arith.constant dense<0.000000e+00> : vector<64x512xf32>
    %8 = tpu.matmul %6, %7, %cst {dimension_numbers = #tpu.dot_dimension_numbers<[1], [0], [0], [1], [0, 0, 1, 1], [], []>} : vector<64x256xbf16>, vector<256x512xbf16>, vector<64x512xf32> -> vector<64x512xf32>
    %c0_3 = arith.constant 0 : index
    %c0_4 = arith.constant 0 : index
    %9 = vector.load %arg3[%c0_3, %c0_4] : memref<1x512xf32, #tpu.memory_space<vmem>>, vector<1x512xf32>
    %10 = vector.broadcast %9 : vector<1x512xf32> to vector<64x512xf32>
    %11 = arith.addf %8, %10 : vector<64x512xf32>
    %12 = arith.index_cast %3 : i32 to index
    %c0_5 = arith.constant 0 : index
    %13 = vector.load %arg10[%12, %c0_5] : memref<64x512xf32, #tpu.memory_space<vmem>>, vector<64x512xf32>
    tpu.vector_store %arg10[%12, %c0_5], %11 {strides = array<i32>} : memref<64x512xf32, #tpu.memory_space<vmem>>, vector<64x512xf32>,
    %c1_i32_6 = arith.constant 1 : i32
    %c0_i32_7 = arith.constant 0 : i32
    %14 = arith.cmpi eq, %arg0, %c0_i32_7 : i32
    %15 = arith.extui %14 : i1 to i32
    %c0_i32_8 = arith.constant 0 : i32
    %16 = arith.cmpi ne, %15, %c0_i32_8 : i32
    scf.if %16 {
      %cst_85 = arith.constant 0.000000e+00 : f32
      %232 = vector.broadcast %cst_85 : f32 to vector<8x128xf32>
      %c0_86 = arith.constant 0 : index
      %c0_87 = arith.constant 0 : index
      %233 = vector.load %arg11[%c0_86, %c0_87] : memref<8x128xf32, #tpu.memory_space<vmem>>, vector<8x128xf32>
      tpu.vector_store %arg11[%c0_86, %c0_87], %232 {strides = array<i32>} : memref<8x128xf32, #tpu.memory_space<vmem>>, vector<8x128xf32>,
      %cst_88 = arith.constant 0.000000e+00 : f32
      %234 = vector.broadcast %cst_88 : f32 to vector<8x128xf32>
      %c0_89 = arith.constant 0 : index
      %c0_90 = arith.constant 0 : index
      %235 = vector.load %arg12[%c0_89, %c0_90] : memref<8x128xf32, #tpu.memory_space<vmem>>, vector<8x128xf32>
      tpu.vector_store %arg12[%c0_89, %c0_90], %234 {strides = array<i32>} : memref<8x128xf32, #tpu.memory_space<vmem>>, vector<8x128xf32>,
      %c0_91 = arith.constant 0 : index
      %c0_92 = arith.constant 0 : index
      %236 = vector.load %arg10[%c0_91, %c0_92] : memref<64x512xf32, #tpu.memory_space<vmem>>, vector<8x512xf32>
      %237 = tpu.iota {dimensions = array<i32: 1>} : vector<8x512xi32>
      %c64_i32_93 = arith.constant 64 : i32
      %238 = vector.broadcast %c64_i32_93 : i32 to vector<8x512xi32>
      %239 = arith.cmpi sge, %237, %238 : vector<8x512xi32>
      %c128_i32 = arith.constant 128 : i32
      %240 = vector.broadcast %c128_i32 : i32 to vector<8x512xi32>
      %241 = arith.cmpi slt, %237, %240 : vector<8x512xi32>
      %242 = arith.andi %239, %241 : vector<8x512xi1>
      %cst_94 = arith.constant -1.000000e+30 : f32
      %243 = vector.broadcast %cst_94 : f32 to vector<8x512xf32>
      %244 = arith.select %242, %243, %236 : vector<8x512xi1>, vector<8x512xf32>
      %c0_95 = arith.constant 0 : index
      %c0_96 = arith.constant 0 : index
      %245 = vector.load %arg10[%c0_95, %c0_96] : memref<64x512xf32, #tpu.memory_space<vmem>>, vector<8x512xf32>
      tpu.vector_store %arg10[%c0_95, %c0_96], %244 {strides = array<i32>} : memref<64x512xf32, #tpu.memory_space<vmem>>, vector<8x512xf32>,
    } else {
    }
    %c0_9 = arith.constant 0 : index
    %c0_10 = arith.constant 0 : index
    %17 = vector.load %arg11[%c0_9, %c0_10] : memref<8x128xf32, #tpu.memory_space<vmem>>, vector<8x128xf32>
    %c0_11 = arith.constant 0 : index
    %c0_12 = arith.constant 0 : index
    %18 = vector.load %arg12[%c0_11, %c0_12] : memref<8x128xf32, #tpu.memory_space<vmem>>, vector<8x128xf32>
    %c0_i32_13 = arith.constant 0 : i32
    %c8_i32 = arith.constant 8 : i32
    %19 = arith.muli %c0_i32_13, %c8_i32 : i32
    %20 = tpu.assume_multiple %19, 8 : i32
    %21 = arith.index_cast %20 : i32 to index
    %c0_14 = arith.constant 0 : index
    %22 = vector.load %arg10[%21, %c0_14] : memref<64x512xf32, #tpu.memory_space<vmem>>, vector<8x512xf32>
    %23 = arith.truncf %17 : vector<8x128xf32> to vector<8x128xbf16>
    %c0_15 = arith.constant 0 : index
    %c0_16 = arith.constant 0 : index
    %24 = vector.load %arg4[%c0_15, %c0_16] : memref<128x512xbf16, #tpu.memory_space<vmem>>, vector<128x512xbf16>
    %cst_17 = arith.constant dense<0.000000e+00> : vector<8x512xf32>
    %25 = tpu.matmul %23, %24, %cst_17 {dimension_numbers = #tpu.dot_dimension_numbers<[1], [0], [0], [1], [0, 0, 1, 1], [], []>} : vector<8x128xbf16>, vector<128x512xbf16>, vector<8x512xf32> -> vector<8x512xf32>
    %26 = arith.addf %22, %25 : vector<8x512xf32>
    %27 = vector.extract_strided_slice %26 {offsets = [0, 0], sizes = [8, 384], strides = [1, 1]} : vector<8x512xf32> to vector<8x384xf32>
    %cst_18 = arith.constant 5.000000e-01 : f32
    %28 = vector.broadcast %cst_18 : f32 to vector<8x384xf32>
    %29 = arith.mulf %27, %28 : vector<8x384xf32>
    %30 = math.tanh %29 : vector<8x384xf32>
    %cst_19 = arith.constant 5.000000e-01 : f32
    %31 = vector.broadcast %cst_19 : f32 to vector<8x384xf32>
    %32 = arith.mulf %30, %31 : vector<8x384xf32>
    %cst_20 = arith.constant 5.000000e-01 : f32
    %33 = vector.broadcast %cst_20 : f32 to vector<8x384xf32>
    %34 = arith.addf %32, %33 : vector<8x384xf32>
    %35 = vector.extract_strided_slice %34 {offsets = [0, 0], sizes = [8, 128], strides = [1, 1]} : vector<8x384xf32> to vector<8x128xf32>
    %36 = vector.extract_strided_slice %34 {offsets = [0, 128], sizes = [8, 128], strides = [1, 1]} : vector<8x384xf32> to vector<8x128xf32>
    %37 = vector.extract_strided_slice %34 {offsets = [0, 256], sizes = [8, 128], strides = [1, 1]} : vector<8x384xf32> to vector<8x128xf32>
    %38 = vector.extract_strided_slice %26 {offsets = [0, 384], sizes = [8, 128], strides = [1, 1]} : vector<8x512xf32> to vector<8x128xf32>
    %39 = math.tanh %38 : vector<8x128xf32>
    %40 = arith.mulf %36, %18 : vector<8x128xf32>
    %41 = arith.mulf %35, %39 : vector<8x128xf32>
    %42 = arith.addf %40, %41 : vector<8x128xf32>
    %43 = math.tanh %42 : vector<8x128xf32>
    %44 = arith.mulf %37, %43 : vector<8x128xf32>
    %c1_i32_21 = arith.constant 1 : i32
    %c8_i32_22 = arith.constant 8 : i32
    %45 = arith.muli %c1_i32_21, %c8_i32_22 : i32
    %46 = tpu.assume_multiple %45, 8 : i32
    %47 = arith.index_cast %46 : i32 to index
    %c0_23 = arith.constant 0 : index
    %48 = vector.load %arg10[%47, %c0_23] : memref<64x512xf32, #tpu.memory_space<vmem>>, vector<8x512xf32>
    %49 = arith.truncf %44 : vector<8x128xf32> to vector<8x128xbf16>
    %c0_24 = arith.constant 0 : index
    %c0_25 = arith.constant 0 : index
    %50 = vector.load %arg4[%c0_24, %c0_25] : memref<128x512xbf16, #tpu.memory_space<vmem>>, vector<128x512xbf16>
    %cst_26 = arith.constant dense<0.000000e+00> : vector<8x512xf32>
    %51 = tpu.matmul %49, %50, %cst_26 {dimension_numbers = #tpu.dot_dimension_numbers<[1], [0], [0], [1], [0, 0, 1, 1], [], []>} : vector<8x128xbf16>, vector<128x512xbf16>, vector<8x512xf32> -> vector<8x512xf32>
    %52 = arith.addf %48, %51 : vector<8x512xf32>
    %53 = vector.extract_strided_slice %52 {offsets = [0, 0], sizes = [8, 384], strides = [1, 1]} : vector<8x512xf32> to vector<8x384xf32>
    %cst_27 = arith.constant 5.000000e-01 : f32
    %54 = vector.broadcast %cst_27 : f32 to vector<8x384xf32>
    %55 = arith.mulf %53, %54 : vector<8x384xf32>
    %56 = math.tanh %55 : vector<8x384xf32>
    %cst_28 = arith.constant 5.000000e-01 : f32
    %57 = vector.broadcast %cst_28 : f32 to vector<8x384xf32>
    %58 = arith.mulf %56, %57 : vector<8x384xf32>
    %cst_29 = arith.constant 5.000000e-01 : f32
    %59 = vector.broadcast %cst_29 : f32 to vector<8x384xf32>
    %60 = arith.addf %58, %59 : vector<8x384xf32>
    %61 = vector.extract_strided_slice %60 {offsets = [0, 0], sizes = [8, 128], strides = [1, 1]} : vector<8x384xf32> to vector<8x128xf32>
    %62 = vector.extract_strided_slice %60 {offsets = [0, 128], sizes = [8, 128], strides = [1, 1]} : vector<8x384xf32> to vector<8x128xf32>
    %63 = vector.extract_strided_slice %60 {offsets = [0, 256], sizes = [8, 128], strides = [1, 1]} : vector<8x384xf32> to vector<8x128xf32>
    %64 = vector.extract_strided_slice %52 {offsets = [0, 384], sizes = [8, 128], strides = [1, 1]} : vector<8x512xf32> to vector<8x128xf32>
    %65 = math.tanh %64 : vector<8x128xf32>
    %66 = arith.mulf %62, %42 : vector<8x128xf32>
    %67 = arith.mulf %61, %65 : vector<8x128xf32>
    %68 = arith.addf %66, %67 : vector<8x128xf32>
    %69 = math.tanh %68 : vector<8x128xf32>
    %70 = arith.mulf %63, %69 : vector<8x128xf32>
    %c2_i32 = arith.constant 2 : i32
    %c8_i32_30 = arith.constant 8 : i32
    %71 = arith.muli %c2_i32, %c8_i32_30 : i32
    %72 = tpu.assume_multiple %71, 8 : i32
    %73 = arith.index_cast %72 : i32 to index
    %c0_31 = arith.constant 0 : index
    %74 = vector.load %arg10[%73, %c0_31] : memref<64x512xf32, #tpu.memory_space<vmem>>, vector<8x512xf32>
    %75 = arith.truncf %70 : vector<8x128xf32> to vector<8x128xbf16>
    %c0_32 = arith.constant 0 : index
    %c0_33 = arith.constant 0 : index
    %76 = vector.load %arg4[%c0_32, %c0_33] : memref<128x512xbf16, #tpu.memory_space<vmem>>, vector<128x512xbf16>
    %cst_34 = arith.constant dense<0.000000e+00> : vector<8x512xf32>
    %77 = tpu.matmul %75, %76, %cst_34 {dimension_numbers = #tpu.dot_dimension_numbers<[1], [0], [0], [1], [0, 0, 1, 1], [], []>} : vector<8x128xbf16>, vector<128x512xbf16>, vector<8x512xf32> -> vector<8x512xf32>
    %78 = arith.addf %74, %77 : vector<8x512xf32>
    %79 = vector.extract_strided_slice %78 {offsets = [0, 0], sizes = [8, 384], strides = [1, 1]} : vector<8x512xf32> to vector<8x384xf32>
    %cst_35 = arith.constant 5.000000e-01 : f32
    %80 = vector.broadcast %cst_35 : f32 to vector<8x384xf32>
    %81 = arith.mulf %79, %80 : vector<8x384xf32>
    %82 = math.tanh %81 : vector<8x384xf32>
    %cst_36 = arith.constant 5.000000e-01 : f32
    %83 = vector.broadcast %cst_36 : f32 to vector<8x384xf32>
    %84 = arith.mulf %82, %83 : vector<8x384xf32>
    %cst_37 = arith.constant 5.000000e-01 : f32
    %85 = vector.broadcast %cst_37 : f32 to vector<8x384xf32>
    %86 = arith.addf %84, %85 : vector<8x384xf32>
    %87 = vector.extract_strided_slice %86 {offsets = [0, 0], sizes = [8, 128], strides = [1, 1]} : vector<8x384xf32> to vector<8x128xf32>
    %88 = vector.extract_strided_slice %86 {offsets = [0, 128], sizes = [8, 128], strides = [1, 1]} : vector<8x384xf32> to vector<8x128xf32>
    %89 = vector.extract_strided_slice %86 {offsets = [0, 256], sizes = [8, 128], strides = [1, 1]} : vector<8x384xf32> to vector<8x128xf32>
    %90 = vector.extract_strided_slice %78 {offsets = [0, 384], sizes = [8, 128], strides = [1, 1]} : vector<8x512xf32> to vector<8x128xf32>
    %91 = math.tanh %90 : vector<8x128xf32>
    %92 = arith.mulf %88, %68 : vector<8x128xf32>
    %93 = arith.mulf %87, %91 : vector<8x128xf32>
    %94 = arith.addf %92, %93 : vector<8x128xf32>
    %95 = math.tanh %94 : vector<8x128xf32>
    %96 = arith.mulf %89, %95 : vector<8x128xf32>
    %c3_i32 = arith.constant 3 : i32
    %c8_i32_38 = arith.constant 8 : i32
    %97 = arith.muli %c3_i32, %c8_i32_38 : i32
    %98 = tpu.assume_multiple %97, 8 : i32
    %99 = arith.index_cast %98 : i32 to index
    %c0_39 = arith.constant 0 : index
    %100 = vector.load %arg10[%99, %c0_39] : memref<64x512xf32, #tpu.memory_space<vmem>>, vector<8x512xf32>
    %101 = arith.truncf %96 : vector<8x128xf32> to vector<8x128xbf16>
    %c0_40 = arith.constant 0 : index
    %c0_41 = arith.constant 0 : index
    %102 = vector.load %arg4[%c0_40, %c0_41] : memref<128x512xbf16, #tpu.memory_space<vmem>>, vector<128x512xbf16>
    %cst_42 = arith.constant dense<0.000000e+00> : vector<8x512xf32>
    %103 = tpu.matmul %101, %102, %cst_42 {dimension_numbers = #tpu.dot_dimension_numbers<[1], [0], [0], [1], [0, 0, 1, 1], [], []>} : vector<8x128xbf16>, vector<128x512xbf16>, vector<8x512xf32> -> vector<8x512xf32>
    %104 = arith.addf %100, %103 : vector<8x512xf32>
    %105 = vector.extract_strided_slice %104 {offsets = [0, 0], sizes = [8, 384], strides = [1, 1]} : vector<8x512xf32> to vector<8x384xf32>
    %cst_43 = arith.constant 5.000000e-01 : f32
    %106 = vector.broadcast %cst_43 : f32 to vector<8x384xf32>
    %107 = arith.mulf %105, %106 : vector<8x384xf32>
    %108 = math.tanh %107 : vector<8x384xf32>
    %cst_44 = arith.constant 5.000000e-01 : f32
    %109 = vector.broadcast %cst_44 : f32 to vector<8x384xf32>
    %110 = arith.mulf %108, %109 : vector<8x384xf32>
    %cst_45 = arith.constant 5.000000e-01 : f32
    %111 = vector.broadcast %cst_45 : f32 to vector<8x384xf32>
    %112 = arith.addf %110, %111 : vector<8x384xf32>
    %113 = vector.extract_strided_slice %112 {offsets = [0, 0], sizes = [8, 128], strides = [1, 1]} : vector<8x384xf32> to vector<8x128xf32>
    %114 = vector.extract_strided_slice %112 {offsets = [0, 128], sizes = [8, 128], strides = [1, 1]} : vector<8x384xf32> to vector<8x128xf32>
    %115 = vector.extract_strided_slice %112 {offsets = [0, 256], sizes = [8, 128], strides = [1, 1]} : vector<8x384xf32> to vector<8x128xf32>
    %116 = vector.extract_strided_slice %104 {offsets = [0, 384], sizes = [8, 128], strides = [1, 1]} : vector<8x512xf32> to vector<8x128xf32>
    %117 = math.tanh %116 : vector<8x128xf32>
    %118 = arith.mulf %114, %94 : vector<8x128xf32>
    %119 = arith.mulf %113, %117 : vector<8x128xf32>
    %120 = arith.addf %118, %119 : vector<8x128xf32>
    %121 = math.tanh %120 : vector<8x128xf32>
    %122 = arith.mulf %115, %121 : vector<8x128xf32>
    %c4_i32 = arith.constant 4 : i32
    %c8_i32_46 = arith.constant 8 : i32
    %123 = arith.muli %c4_i32, %c8_i32_46 : i32
    %124 = tpu.assume_multiple %123, 8 : i32
    %125 = arith.index_cast %124 : i32 to index
    %c0_47 = arith.constant 0 : index
    %126 = vector.load %arg10[%125, %c0_47] : memref<64x512xf32, #tpu.memory_space<vmem>>, vector<8x512xf32>
    %127 = arith.truncf %122 : vector<8x128xf32> to vector<8x128xbf16>
    %c0_48 = arith.constant 0 : index
    %c0_49 = arith.constant 0 : index
    %128 = vector.load %arg4[%c0_48, %c0_49] : memref<128x512xbf16, #tpu.memory_space<vmem>>, vector<128x512xbf16>
    %cst_50 = arith.constant dense<0.000000e+00> : vector<8x512xf32>
    %129 = tpu.matmul %127, %128, %cst_50 {dimension_numbers = #tpu.dot_dimension_numbers<[1], [0], [0], [1], [0, 0, 1, 1], [], []>} : vector<8x128xbf16>, vector<128x512xbf16>, vector<8x512xf32> -> vector<8x512xf32>
    %130 = arith.addf %126, %129 : vector<8x512xf32>
    %131 = vector.extract_strided_slice %130 {offsets = [0, 0], sizes = [8, 384], strides = [1, 1]} : vector<8x512xf32> to vector<8x384xf32>
    %cst_51 = arith.constant 5.000000e-01 : f32
    %132 = vector.broadcast %cst_51 : f32 to vector<8x384xf32>
    %133 = arith.mulf %131, %132 : vector<8x384xf32>
    %134 = math.tanh %133 : vector<8x384xf32>
    %cst_52 = arith.constant 5.000000e-01 : f32
    %135 = vector.broadcast %cst_52 : f32 to vector<8x384xf32>
    %136 = arith.mulf %134, %135 : vector<8x384xf32>
    %cst_53 = arith.constant 5.000000e-01 : f32
    %137 = vector.broadcast %cst_53 : f32 to vector<8x384xf32>
    %138 = arith.addf %136, %137 : vector<8x384xf32>
    %139 = vector.extract_strided_slice %138 {offsets = [0, 0], sizes = [8, 128], strides = [1, 1]} : vector<8x384xf32> to vector<8x128xf32>
    %140 = vector.extract_strided_slice %138 {offsets = [0, 128], sizes = [8, 128], strides = [1, 1]} : vector<8x384xf32> to vector<8x128xf32>
    %141 = vector.extract_strided_slice %138 {offsets = [0, 256], sizes = [8, 128], strides = [1, 1]} : vector<8x384xf32> to vector<8x128xf32>
    %142 = vector.extract_strided_slice %130 {offsets = [0, 384], sizes = [8, 128], strides = [1, 1]} : vector<8x512xf32> to vector<8x128xf32>
    %143 = math.tanh %142 : vector<8x128xf32>
    %144 = arith.mulf %140, %120 : vector<8x128xf32>
    %145 = arith.mulf %139, %143 : vector<8x128xf32>
    %146 = arith.addf %144, %145 : vector<8x128xf32>
    %147 = math.tanh %146 : vector<8x128xf32>
    %148 = arith.mulf %141, %147 : vector<8x128xf32>
    %c5_i32 = arith.constant 5 : i32
    %c8_i32_54 = arith.constant 8 : i32
    %149 = arith.muli %c5_i32, %c8_i32_54 : i32
    %150 = tpu.assume_multiple %149, 8 : i32
    %151 = arith.index_cast %150 : i32 to index
    %c0_55 = arith.constant 0 : index
    %152 = vector.load %arg10[%151, %c0_55] : memref<64x512xf32, #tpu.memory_space<vmem>>, vector<8x512xf32>
    %153 = arith.truncf %148 : vector<8x128xf32> to vector<8x128xbf16>
    %c0_56 = arith.constant 0 : index
    %c0_57 = arith.constant 0 : index
    %154 = vector.load %arg4[%c0_56, %c0_57] : memref<128x512xbf16, #tpu.memory_space<vmem>>, vector<128x512xbf16>
    %cst_58 = arith.constant dense<0.000000e+00> : vector<8x512xf32>
    %155 = tpu.matmul %153, %154, %cst_58 {dimension_numbers = #tpu.dot_dimension_numbers<[1], [0], [0], [1], [0, 0, 1, 1], [], []>} : vector<8x128xbf16>, vector<128x512xbf16>, vector<8x512xf32> -> vector<8x512xf32>
    %156 = arith.addf %152, %155 : vector<8x512xf32>
    %157 = vector.extract_strided_slice %156 {offsets = [0, 0], sizes = [8, 384], strides = [1, 1]} : vector<8x512xf32> to vector<8x384xf32>
    %cst_59 = arith.constant 5.000000e-01 : f32
    %158 = vector.broadcast %cst_59 : f32 to vector<8x384xf32>
    %159 = arith.mulf %157, %158 : vector<8x384xf32>
    %160 = math.tanh %159 : vector<8x384xf32>
    %cst_60 = arith.constant 5.000000e-01 : f32
    %161 = vector.broadcast %cst_60 : f32 to vector<8x384xf32>
    %162 = arith.mulf %160, %161 : vector<8x384xf32>
    %cst_61 = arith.constant 5.000000e-01 : f32
    %163 = vector.broadcast %cst_61 : f32 to vector<8x384xf32>
    %164 = arith.addf %162, %163 : vector<8x384xf32>
    %165 = vector.extract_strided_slice %164 {offsets = [0, 0], sizes = [8, 128], strides = [1, 1]} : vector<8x384xf32> to vector<8x128xf32>
    %166 = vector.extract_strided_slice %164 {offsets = [0, 128], sizes = [8, 128], strides = [1, 1]} : vector<8x384xf32> to vector<8x128xf32>
    %167 = vector.extract_strided_slice %164 {offsets = [0, 256], sizes = [8, 128], strides = [1, 1]} : vector<8x384xf32> to vector<8x128xf32>
    %168 = vector.extract_strided_slice %156 {offsets = [0, 384], sizes = [8, 128], strides = [1, 1]} : vector<8x512xf32> to vector<8x128xf32>
    %169 = math.tanh %168 : vector<8x128xf32>
    %170 = arith.mulf %166, %146 : vector<8x128xf32>
    %171 = arith.mulf %165, %169 : vector<8x128xf32>
    %172 = arith.addf %170, %171 : vector<8x128xf32>
    %173 = math.tanh %172 : vector<8x128xf32>
    %174 = arith.mulf %167, %173 : vector<8x128xf32>
    %c6_i32 = arith.constant 6 : i32
    %c8_i32_62 = arith.constant 8 : i32
    %175 = arith.muli %c6_i32, %c8_i32_62 : i32
    %176 = tpu.assume_multiple %175, 8 : i32
    %177 = arith.index_cast %176 : i32 to index
    %c0_63 = arith.constant 0 : index
    %178 = vector.load %arg10[%177, %c0_63] : memref<64x512xf32, #tpu.memory_space<vmem>>, vector<8x512xf32>
    %179 = arith.truncf %174 : vector<8x128xf32> to vector<8x128xbf16>
    %c0_64 = arith.constant 0 : index
    %c0_65 = arith.constant 0 : index
    %180 = vector.load %arg4[%c0_64, %c0_65] : memref<128x512xbf16, #tpu.memory_space<vmem>>, vector<128x512xbf16>
    %cst_66 = arith.constant dense<0.000000e+00> : vector<8x512xf32>
    %181 = tpu.matmul %179, %180, %cst_66 {dimension_numbers = #tpu.dot_dimension_numbers<[1], [0], [0], [1], [0, 0, 1, 1], [], []>} : vector<8x128xbf16>, vector<128x512xbf16>, vector<8x512xf32> -> vector<8x512xf32>
    %182 = arith.addf %178, %181 : vector<8x512xf32>
    %183 = vector.extract_strided_slice %182 {offsets = [0, 0], sizes = [8, 384], strides = [1, 1]} : vector<8x512xf32> to vector<8x384xf32>
    %cst_67 = arith.constant 5.000000e-01 : f32
    %184 = vector.broadcast %cst_67 : f32 to vector<8x384xf32>
    %185 = arith.mulf %183, %184 : vector<8x384xf32>
    %186 = math.tanh %185 : vector<8x384xf32>
    %cst_68 = arith.constant 5.000000e-01 : f32
    %187 = vector.broadcast %cst_68 : f32 to vector<8x384xf32>
    %188 = arith.mulf %186, %187 : vector<8x384xf32>
    %cst_69 = arith.constant 5.000000e-01 : f32
    %189 = vector.broadcast %cst_69 : f32 to vector<8x384xf32>
    %190 = arith.addf %188, %189 : vector<8x384xf32>
    %191 = vector.extract_strided_slice %190 {offsets = [0, 0], sizes = [8, 128], strides = [1, 1]} : vector<8x384xf32> to vector<8x128xf32>
    %192 = vector.extract_strided_slice %190 {offsets = [0, 128], sizes = [8, 128], strides = [1, 1]} : vector<8x384xf32> to vector<8x128xf32>
    %193 = vector.extract_strided_slice %190 {offsets = [0, 256], sizes = [8, 128], strides = [1, 1]} : vector<8x384xf32> to vector<8x128xf32>
    %194 = vector.extract_strided_slice %182 {offsets = [0, 384], sizes = [8, 128], strides = [1, 1]} : vector<8x512xf32> to vector<8x128xf32>
    %195 = math.tanh %194 : vector<8x128xf32>
    %196 = arith.mulf %192, %172 : vector<8x128xf32>
    %197 = arith.mulf %191, %195 : vector<8x128xf32>
    %198 = arith.addf %196, %197 : vector<8x128xf32>
    %199 = math.tanh %198 : vector<8x128xf32>
    %200 = arith.mulf %193, %199 : vector<8x128xf32>
    %c7_i32 = arith.constant 7 : i32
    %c8_i32_70 = arith.constant 8 : i32
    %201 = arith.muli %c7_i32, %c8_i32_70 : i32
    %202 = tpu.assume_multiple %201, 8 : i32
    %203 = arith.index_cast %202 : i32 to index
    %c0_71 = arith.constant 0 : index
    %204 = vector.load %arg10[%203, %c0_71] : memref<64x512xf32, #tpu.memory_space<vmem>>, vector<8x512xf32>
    %205 = arith.truncf %200 : vector<8x128xf32> to vector<8x128xbf16>
    %c0_72 = arith.constant 0 : index
    %c0_73 = arith.constant 0 : index
    %206 = vector.load %arg4[%c0_72, %c0_73] : memref<128x512xbf16, #tpu.memory_space<vmem>>, vector<128x512xbf16>
    %cst_74 = arith.constant dense<0.000000e+00> : vector<8x512xf32>
    %207 = tpu.matmul %205, %206, %cst_74 {dimension_numbers = #tpu.dot_dimension_numbers<[1], [0], [0], [1], [0, 0, 1, 1], [], []>} : vector<8x128xbf16>, vector<128x512xbf16>, vector<8x512xf32> -> vector<8x512xf32>
    %208 = arith.addf %204, %207 : vector<8x512xf32>
    %209 = vector.extract_strided_slice %208 {offsets = [0, 0], sizes = [8, 384], strides = [1, 1]} : vector<8x512xf32> to vector<8x384xf32>
    %cst_75 = arith.constant 5.000000e-01 : f32
    %210 = vector.broadcast %cst_75 : f32 to vector<8x384xf32>
    %211 = arith.mulf %209, %210 : vector<8x384xf32>
    %212 = math.tanh %211 : vector<8x384xf32>
    %cst_76 = arith.constant 5.000000e-01 : f32
    %213 = vector.broadcast %cst_76 : f32 to vector<8x384xf32>
    %214 = arith.mulf %212, %213 : vector<8x384xf32>
    %cst_77 = arith.constant 5.000000e-01 : f32
    %215 = vector.broadcast %cst_77 : f32 to vector<8x384xf32>
    %216 = arith.addf %214, %215 : vector<8x384xf32>
    %217 = vector.extract_strided_slice %216 {offsets = [0, 0], sizes = [8, 128], strides = [1, 1]} : vector<8x384xf32> to vector<8x128xf32>
    %218 = vector.extract_strided_slice %216 {offsets = [0, 128], sizes = [8, 128], strides = [1, 1]} : vector<8x384xf32> to vector<8x128xf32>
    %219 = vector.extract_strided_slice %216 {offsets = [0, 256], sizes = [8, 128], strides = [1, 1]} : vector<8x384xf32> to vector<8x128xf32>
    %220 = vector.extract_strided_slice %208 {offsets = [0, 384], sizes = [8, 128], strides = [1, 1]} : vector<8x512xf32> to vector<8x128xf32>
    %221 = math.tanh %220 : vector<8x128xf32>
    %222 = arith.mulf %218, %198 : vector<8x128xf32>
    %223 = arith.mulf %217, %221 : vector<8x128xf32>
    %224 = arith.addf %222, %223 : vector<8x128xf32>
    %225 = math.tanh %224 : vector<8x128xf32>
    %226 = arith.mulf %219, %225 : vector<8x128xf32>
    %c8_i32_78 = arith.constant 8 : i32
    %c0_79 = arith.constant 0 : index
    %c0_80 = arith.constant 0 : index
    %227 = vector.load %arg11[%c0_79, %c0_80] : memref<8x128xf32, #tpu.memory_space<vmem>>, vector<8x128xf32>
    tpu.vector_store %arg11[%c0_79, %c0_80], %226 {strides = array<i32>} : memref<8x128xf32, #tpu.memory_space<vmem>>, vector<8x128xf32>,
    %c0_81 = arith.constant 0 : index
    %c0_82 = arith.constant 0 : index
    %228 = vector.load %arg12[%c0_81, %c0_82] : memref<8x128xf32, #tpu.memory_space<vmem>>, vector<8x128xf32>
    tpu.vector_store %arg12[%c0_81, %c0_82], %224 {strides = array<i32>} : memref<8x128xf32, #tpu.memory_space<vmem>>, vector<8x128xf32>,
    %c0_i32_83 = arith.constant 0 : i32
    %229 = arith.cmpi eq, %arg0, %c0_i32_83 : i32
    %230 = arith.extui %229 : i1 to i32
    %c0_i32_84 = arith.constant 0 : i32
    %231 = arith.cmpi ne, %230, %c0_i32_84 : i32
    scf.if %231 {
      %c0_85 = arith.constant 0 : index
      %c0_86 = arith.constant 0 : index
      %232 = vector.load %arg11[%c0_85, %c0_86] : memref<8x128xf32, #tpu.memory_space<vmem>>, vector<8x128xf32>
      %c0_87 = arith.constant 0 : index
      %c0_88 = arith.constant 0 : index
      %233 = vector.load %arg12[%c0_87, %c0_88] : memref<8x128xf32, #tpu.memory_space<vmem>>, vector<8x128xf32>
      %234 = vector.extract_strided_slice %233 {offsets = [0, 64], sizes = [8, 64], strides = [1, 1]} : vector<8x128xf32> to vector<8x64xf32>
      %235 = arith.truncf %232 : vector<8x128xf32> to vector<8x128xbf16>
      %c0_89 = arith.constant 0 : index
      %c0_90 = arith.constant 0 : index
      %236 = vector.load %arg5[%c0_89, %c0_90] : memref<128x256xbf16, #tpu.memory_space<vmem>>, vector<128x256xbf16>
      %cst_91 = arith.constant dense<0.000000e+00> : vector<8x256xf32>
      %237 = tpu.matmul %235, %236, %cst_91 {dimension_numbers = #tpu.dot_dimension_numbers<[1], [0], [0], [1], [0, 0, 1, 1], [], []>} : vector<8x128xbf16>, vector<128x256xbf16>, vector<8x256xf32> -> vector<8x256xf32>
      %c0_92 = arith.constant 0 : index
      %c0_93 = arith.constant 0 : index
      %238 = vector.load %arg6[%c0_92, %c0_93] : memref<1x256xf32, #tpu.memory_space<vmem>>, vector<1x256xf32>
      %239 = vector.broadcast %238 : vector<1x256xf32> to vector<8x256xf32>
      %240 = arith.addf %237, %239 : vector<8x256xf32>
      %241 = vector.extract_strided_slice %240 {offsets = [0, 0], sizes = [8, 192], strides = [1, 1]} : vector<8x256xf32> to vector<8x192xf32>
      %cst_94 = arith.constant 5.000000e-01 : f32
      %242 = vector.broadcast %cst_94 : f32 to vector<8x192xf32>
      %243 = arith.mulf %241, %242 : vector<8x192xf32>
      %244 = math.tanh %243 : vector<8x192xf32>
      %cst_95 = arith.constant 5.000000e-01 : f32
      %245 = vector.broadcast %cst_95 : f32 to vector<8x192xf32>
      %246 = arith.mulf %244, %245 : vector<8x192xf32>
      %cst_96 = arith.constant 5.000000e-01 : f32
      %247 = vector.broadcast %cst_96 : f32 to vector<8x192xf32>
      %248 = arith.addf %246, %247 : vector<8x192xf32>
      %249 = vector.extract_strided_slice %248 {offsets = [0, 0], sizes = [8, 64], strides = [1, 1]} : vector<8x192xf32> to vector<8x64xf32>
      %250 = vector.extract_strided_slice %248 {offsets = [0, 64], sizes = [8, 64], strides = [1, 1]} : vector<8x192xf32> to vector<8x64xf32>
      %251 = vector.extract_strided_slice %248 {offsets = [0, 128], sizes = [8, 64], strides = [1, 1]} : vector<8x192xf32> to vector<8x64xf32>
      %252 = vector.extract_strided_slice %240 {offsets = [0, 192], sizes = [8, 64], strides = [1, 1]} : vector<8x256xf32> to vector<8x64xf32>
      %253 = math.tanh %252 : vector<8x64xf32>
      %254 = arith.mulf %250, %234 : vector<8x64xf32>
      %255 = arith.mulf %249, %253 : vector<8x64xf32>
      %256 = arith.addf %254, %255 : vector<8x64xf32>
      %257 = math.tanh %256 : vector<8x64xf32>
      %258 = arith.mulf %251, %257 : vector<8x64xf32>
      %c0_97 = arith.constant 0 : index
      %c0_98 = arith.constant 0 : index
      %259 = vector.load %arg7[%c0_97, %c0_98] : memref<64x128xf32, #tpu.memory_space<vmem>>, vector<64x128xf32>
      %cst_99 = arith.constant dense<0.000000e+00> : vector<8x128xf32>
      %260 = tpu.matmul %258, %259, %cst_99 {dimension_numbers = #tpu.dot_dimension_numbers<[1], [0], [0], [1], [0, 0, 1, 1], [], []>} : vector<8x64xf32>, vector<64x128xf32>, vector<8x128xf32> -> vector<8x128xf32>
      %c0_100 = arith.constant 0 : index
      %c0_101 = arith.constant 0 : index
      %261 = vector.load %arg8[%c0_100, %c0_101] : memref<1x128xf32, #tpu.memory_space<vmem>>, vector<1x128xf32>
      %262 = vector.broadcast %261 : vector<1x128xf32> to vector<8x128xf32>
      %263 = arith.addf %260, %262 : vector<8x128xf32>
      %cst_102 = arith.constant 5.000000e-01 : f32
      %264 = vector.broadcast %cst_102 : f32 to vector<8x128xf32>
      %265 = arith.mulf %263, %264 : vector<8x128xf32>
      %266 = math.tanh %265 : vector<8x128xf32>
      %cst_103 = arith.constant 5.000000e-01 : f32
      %267 = vector.broadcast %cst_103 : f32 to vector<8x128xf32>
      %268 = arith.mulf %266, %267 : vector<8x128xf32>
      %cst_104 = arith.constant 5.000000e-01 : f32
      %269 = vector.broadcast %cst_104 : f32 to vector<8x128xf32>
      %270 = arith.addf %268, %269 : vector<8x128xf32>
      %c0_105 = arith.constant 0 : index
      %c0_106 = arith.constant 0 : index
      %271 = vector.load %arg9[%c0_105, %c0_106] : memref<8x128xf32, #tpu.memory_space<vmem>>, vector<8x128xf32>
      tpu.vector_store %arg9[%c0_105, %c0_106], %270 {strides = array<i32>} : memref<8x128xf32, #tpu.memory_space<vmem>>, vector<8x128xf32>,
    } else {
    }
    return
  }
  func.func @transform_0(%arg0: i32) -> (i32, i32) {
    %c0_i32 = arith.constant 0 : i32
    %c0_i32_0 = arith.constant 0 : i32
    return %arg0, %c0_i32 : i32, i32
  }
  func.func @transform_1(%arg0: i32) -> (i32, i32) {
    %c0_i32 = arith.constant 0 : i32
    %c0_i32_0 = arith.constant 0 : i32
    %c0_i32_1 = arith.constant 0 : i32
    return %c0_i32, %c0_i32_0 : i32, i32
  }
  func.func @transform_2(%arg0: i32) -> (i32, i32) {
    %c0_i32 = arith.constant 0 : i32
    %c0_i32_0 = arith.constant 0 : i32
    %c0_i32_1 = arith.constant 0 : i32
    return %c0_i32, %c0_i32_0 : i32, i32
  }
  func.func @transform_3(%arg0: i32) -> (i32, i32) {
    %c0_i32 = arith.constant 0 : i32
    %c0_i32_0 = arith.constant 0 : i32
    %c0_i32_1 = arith.constant 0 : i32
    return %c0_i32, %c0_i32_0 : i32, i32
  }
  func.func @transform_4(%arg0: i32) -> (i32, i32) {
    %c0_i32 = arith.constant 0 : i32
    %c0_i32_0 = arith.constant 0 : i32
    %c0_i32_1 = arith.constant 0 : i32
    return %c0_i32, %c0_i32_0 : i32, i32
  }
  func.func @transform_5(%arg0: i32) -> (i32, i32) {
    %c0_i32 = arith.constant 0 : i32
    %c0_i32_0 = arith.constant 0 : i32
    %c0_i32_1 = arith.constant 0 : i32
    return %c0_i32, %c0_i32_0 : i32, i32
  }
  func.func @transform_6(%arg0: i32) -> (i32, i32) {
    %c0_i32 = arith.constant 0 : i32
    %c0_i32_0 = arith.constant 0 : i32
    %c0_i32_1 = arith.constant 0 : i32
    return %c0_i32, %c0_i32_0 : i32, i32
  }
  func.func @transform_7(%arg0: i32) -> (i32, i32) {
    %c0_i32 = arith.constant 0 : i32
    %c0_i32_0 = arith.constant 0 : i32
    %c0_i32_1 = arith.constant 0 : i32
    return %c0_i32, %c0_i32_0 : i32, i32
  }
  func.func @transform_8(%arg0: i32) -> (i32, i32) {
    %c0_i32 = arith.constant 0 : i32
    %c0_i32_0 = arith.constant 0 : i32
    %c0_i32_1 = arith.constant 0 : i32
    return %c0_i32, %c0_i32_0 : i32, i32
  }
}

</mosaic_0001>

<llo_original>
// kernel: fall_lstm_forward.1
$region0: #{fall_lstm_forward.1}
  #allocation0 [shape = 'u32[]', space=smem, size = 0x4, offset = 0x4, fixed_abs, tag = 'smem constant byte address 0x4 - core index']
  #allocation1 [shape = 'u32[144,128]{1,0:T(1,128)}', space=vmem, size = 0x12000, scoped, tag = 'internal scratch']
  #allocation2 [shape = 'f32[64,512]{1,0:T(8,128)}', space=vmem, size = 0x20000, scoped, tag = 'scratch operand']
  #allocation3 [shape = 'f32[8,128]{1,0:T(8,128)}', space=vmem, size = 0x1000, scoped, tag = 'scratch operand']
  #allocation4 [shape = 'f32[8,128]{1,0:T(8,128)}', space=vmem, size = 0x1000, scoped, tag = 'scratch operand']
  %s0 = inlined_call_operand.vmem [shape: f32[64,256], index: 0, kind: input, shape index: {}]
  %s1 = inlined_call_operand.vmem [shape: bf16[256,512], index: 1, kind: input, shape index: {}]
  %s2 = inlined_call_operand.vmem [shape: f32[1,512], index: 2, kind: input, shape index: {}]
  %s3 = inlined_call_operand.vmem [shape: bf16[128,512], index: 3, kind: input, shape index: {}]
  %s4 = inlined_call_operand.vmem [shape: bf16[128,256], index: 4, kind: input, shape index: {}]
  %s5 = inlined_call_operand.vmem [shape: f32[1,256], index: 5, kind: input, shape index: {}]
  %s6 = inlined_call_operand.vmem [shape: f32[64,128], index: 6, kind: input, shape index: {}]
  %s7 = inlined_call_operand.vmem [shape: f32[1,128], index: 7, kind: input, shape index: {}]
  %s8 = inlined_call_operand.vmem [shape: f32[8,128], index: 8, kind: output, shape index: {}]
  %s9 = sld [smem:[#allocation0]]
  $region50: #{fall_lstm_forward.1} parent=0
    _
  %s11 = ssub.s32 1, %s9
  %s12 = scalar_select 0, %s11, %s9
  // Predicated region
  $region2: #{fall_lstm_forward.1} parent=0 // pred_check
    _
  $region3: #{fall_lstm_forward.1} parent=0 // pred_check_branch
    %14 = sbr.rel (0) target = $region5
  $region4: #{fall_lstm_forward.1} parent=0 // pred_region
    _
  $region5: #{fall_lstm_forward.1} parent=0 // pred_fallthru
    _
  // Predicated region
  $region6: #{fall_lstm_forward.1} parent=0 // pred_check
    _
  $region7: #{fall_lstm_forward.1} parent=0 // pred_check_branch
    %16 = sbr.rel (0) target = $region9
  $region8: #{fall_lstm_forward.1} parent=0 // pred_region
    _
  $region9: #{fall_lstm_forward.1} parent=0 // pred_fallthru
    _
  // Predicated region
  $region10: #{fall_lstm_forward.1} parent=0 // pred_check
    _
  $region11: #{fall_lstm_forward.1} parent=0 // pred_check_branch
    %18 = sbr.rel (0) target = $region13
  $region12: #{fall_lstm_forward.1} parent=0 // pred_region
    _
  $region13: #{fall_lstm_forward.1} parent=0 // pred_fallthru
    _
  // Predicated region
  $region14: #{fall_lstm_forward.1} parent=0 // pred_check
    _
  $region15: #{fall_lstm_forward.1} parent=0 // pred_check_branch
    %20 = sbr.rel (0) target = $region17
  $region16: #{fall_lstm_forward.1} parent=0 // pred_region
    _
  $region17: #{fall_lstm_forward.1} parent=0 // pred_fallthru
    _
  // Predicated region
  $region18: #{fall_lstm_forward.1} parent=0 // pred_check
    _
  $region19: #{fall_lstm_forward.1} parent=0 // pred_check_branch
    %22 = sbr.rel (0) target = $region21
  $region20: #{fall_lstm_forward.1} parent=0 // pred_region
    _
  $region21: #{fall_lstm_forward.1} parent=0 // pred_fallthru
    _
  // Predicated region
  $region22: #{fall_lstm_forward.1} parent=0 // pred_check
    _
  $region23: #{fall_lstm_forward.1} parent=0 // pred_check_branch
    %24 = sbr.rel (0) target = $region25
  $region24: #{fall_lstm_forward.1} parent=0 // pred_region
    _
  $region25: #{fall_lstm_forward.1} parent=0 // pred_fallthru
    _
  // Predicated region
  $region26: #{fall_lstm_forward.1} parent=0 // pred_check
    _
  $region27: #{fall_lstm_forward.1} parent=0 // pred_check_branch
    %26 = sbr.rel (0) target = $region29
  $region28: #{fall_lstm_forward.1} parent=0 // pred_region
    _
  $region29: #{fall_lstm_forward.1} parent=0 // pred_fallthru
    _
  // Predicated region
  $region30: #{fall_lstm_forward.1} parent=0 // pred_check
    _
  $region31: #{fall_lstm_forward.1} parent=0 // pred_check_branch
    %28 = sbr.rel (0) target = $region33
  $region32: #{fall_lstm_forward.1} parent=0 // pred_region
    _
  $region33: #{fall_lstm_forward.1} parent=0 // pred_fallthru
    _
  %s30 = smul.u32 0, 2
  %s31 = smul.addr %s30, 8
  %s32 = scalar_lea.vmem %s0, %s31
  %v33 = vld [vmem:[%s32] sm:$0xff]
  %v34 = vld [vmem:[%s32 + $0x8] sm:$0xff]
  %v35 = vld [vmem:[%s32 + $0x10] sm:$0xff]
  %v36 = vld [vmem:[%s32 + $0x18] sm:$0xff]
  %v37 = vld [vmem:[%s32 + $0x20] sm:$0xff]
  %v38 = vld [vmem:[%s32 + $0x28] sm:$0xff]
  %v39 = vld [vmem:[%s32 + $0x30] sm:$0xff]
  %v40 = vld [vmem:[%s32 + $0x38] sm:$0xff]
  %v41 = vld [vmem:[%s32 + $0x40] sm:$0xff]
  %v42 = vld [vmem:[%s32 + $0x48] sm:$0xff]
  %v43 = vld [vmem:[%s32 + $0x50] sm:$0xff]
  %v44 = vld [vmem:[%s32 + $0x58] sm:$0xff]
  %v45 = vld [vmem:[%s32 + $0x60] sm:$0xff]
  %v46 = vld [vmem:[%s32 + $0x68] sm:$0xff]
  %v47 = vld [vmem:[%s32 + $0x70] sm:$0xff]
  %v48 = vld [vmem:[%s32 + $0x78] sm:$0xff]
  %v49 = vpack.c.bf16 %v35, %v33
  %v50 = vpack.c.bf16 %v36, %v34
  %v51 = vpack.c.bf16 %v39, %v37
  %v52 = vpack.c.bf16 %v40, %v38
  %v53 = vpack.c.bf16 %v43, %v41
  %v54 = vpack.c.bf16 %v44, %v42
  %v55 = vpack.c.bf16 %v47, %v45
  %v56 = vpack.c.bf16 %v48, %v46
  %v57 = vld [vmem:[%s1] sm:$0xff]
  %v58 = vld [vmem:[%s1 + $0x8] sm:$0xff]
  %v59 = vld [vmem:[%s1 + $0x10] sm:$0xff]
  %v60 = vld [vmem:[%s1 + $0x18] sm:$0xff]
  %v61 = vld [vmem:[%s1 + $0x20] sm:$0xff]
  %v62 = vld [vmem:[%s1 + $0x28] sm:$0xff]
  %v63 = vld [vmem:[%s1 + $0x30] sm:$0xff]
  %v64 = vld [vmem:[%s1 + $0x38] sm:$0xff]
  %v65 = vld [vmem:[%s1 + $0x40] sm:$0xff]
  %v66 = vld [vmem:[%s1 + $0x48] sm:$0xff]
  %v67 = vld [vmem:[%s1 + $0x50] sm:$0xff]
  %v68 = vld [vmem:[%s1 + $0x58] sm:$0xff]
  %v69 = vld [vmem:[%s1 + $0x60] sm:$0xff]
  %v70 = vld [vmem:[%s1 + $0x68] sm:$0xff]
  %v71 = vld [vmem:[%s1 + $0x70] sm:$0xff]
  %v72 = vld [vmem:[%s1 + $0x78] sm:$0xff]
  %v73 = vld [vmem:[%s1 + $0x80] sm:$0xff]
  %v74 = vld [vmem:[%s1 + $0x88] sm:$0xff]
  %v75 = vld [vmem:[%s1 + $0x90] sm:$0xff]
  %v76 = vld [vmem:[%s1 + $0x98] sm:$0xff]
  %v77 = vld [vmem:[%s1 + $0xa0] sm:$0xff]
  %v78 = vld [vmem:[%s1 + $0xa8] sm:$0xff]
  %v79 = vld [vmem:[%s1 + $0xb0] sm:$0xff]
  %v80 = vld [vmem:[%s1 + $0xb8] sm:$0xff]
  %v81 = vld [vmem:[%s1 + $0xc0] sm:$0xff]
  %v82 = vld [vmem:[%s1 + $0xc8] sm:$0xff]
  %v83 = vld [vmem:[%s1 + $0xd0] sm:$0xff]
  %v84 = vld [vmem:[%s1 + $0xd8] sm:$0xff]
  %v85 = vld [vmem:[%s1 + $0xe0] sm:$0xff]
  %v86 = vld [vmem:[%s1 + $0xe8] sm:$0xff]
  %v87 = vld [vmem:[%s1 + $0xf0] sm:$0xff]
  %v88 = vld [vmem:[%s1 + $0xf8] sm:$0xff]
  %v89 = vld [vmem:[%s1 + $0x100] sm:$0xff]
  %v90 = vld [vmem:[%s1 + $0x108] sm:$0xff]
  %v91 = vld [vmem:[%s1 + $0x110] sm:$0xff]
  %v92 = vld [vmem:[%s1 + $0x118] sm:$0xff]
  %v93 = vld [vmem:[%s1 + $0x120] sm:$0xff]
  %v94 = vld [vmem:[%s1 + $0x128] sm:$0xff]
  %v95 = vld [vmem:[%s1 + $0x130] sm:$0xff]
  %v96 = vld [vmem:[%s1 + $0x138] sm:$0xff]
  %v97 = vld [vmem:[%s1 + $0x140] sm:$0xff]
  %v98 = vld [vmem:[%s1 + $0x148] sm:$0xff]
  %v99 = vld [vmem:[%s1 + $0x150] sm:$0xff]
  %v100 = vld [vmem:[%s1 + $0x158] sm:$0xff]
  %v101 = vld [vmem:[%s1 + $0x160] sm:$0xff]
  %v102 = vld [vmem:[%s1 + $0x168] sm:$0xff]
  %v103 = vld [vmem:[%s1 + $0x170] sm:$0xff]
  %v104 = vld [vmem:[%s1 + $0x178] sm:$0xff]
  %v105 = vld [vmem:[%s1 + $0x180] sm:$0xff]
  %v106 = vld [vmem:[%s1 + $0x188] sm:$0xff]
  %v107 = vld [vmem:[%s1 + $0x190] sm:$0xff]
  %v108 = vld [vmem:[%s1 + $0x198] sm:$0xff]
  %v109 = vld [vmem:[%s1 + $0x1a0] sm:$0xff]
  %v110 = vld [vmem:[%s1 + $0x1a8] sm:$0xff]
  %v111 = vld [vmem:[%s1 + $0x1b0] sm:$0xff]
  %v112 = vld [vmem:[%s1 + $0x1b8] sm:$0xff]
  %v113 = vld [vmem:[%s1 + $0x1c0] sm:$0xff]
  %v114 = vld [vmem:[%s1 + $0x1c8] sm:$0xff]
  %v115 = vld [vmem:[%s1 + $0x1d0] sm:$0xff]
  %v116 = vld [vmem:[%s1 + $0x1d8] sm:$0xff]
  %v117 = vld [vmem:[%s1 + $0x1e0] sm:$0xff]
  %v118 = vld [vmem:[%s1 + $0x1e8] sm:$0xff]
  %v119 = vld [vmem:[%s1 + $0x1f0] sm:$0xff]
  %v120 = vld [vmem:[%s1 + $0x1f8] sm:$0xff]
  %v121 = vld [vmem:[%s2] sm:$0xf]
  %v123 = vlaneseq
  %v124 = vshrl.u32 %v123, 7
  %v125 = vsub.s32 0, %v124
  %v126 = vrot.slane %v121, %v125
  %v127 = vlaneseq
  %v128 = vshrl.u32 %v127, 7
  %v129 = vsub.s32 1, %v128
  %v130 = vrot.slane %v121, %v129
  %v131 = vlaneseq
  %v132 = vshrl.u32 %v131, 7
  %v133 = vsub.s32 2, %v132
  %v134 = vrot.slane %v121, %v133
  %v135 = vlaneseq
  %v136 = vshrl.u32 %v135, 7
  %v137 = vsub.s32 3, %v136
  %v138 = vrot.slane %v121, %v137
  %v207 = vunpack.c.l.b16 %v57
  %v208 = vunpack.c.h.b16 %v57
  %v209 = vunpack.c.l.b16 %v58
  %v210 = vunpack.c.h.b16 %v58
  %v211 = vunpack.c.l.b16 %v59
  %v212 = vunpack.c.h.b16 %v59
  %v213 = vunpack.c.l.b16 %v60
  %v214 = vunpack.c.h.b16 %v60
  %v215 = vunpack.c.l.b16 %v61
  %v216 = vunpack.c.h.b16 %v61
  %v217 = vunpack.c.l.b16 %v62
  %v218 = vunpack.c.h.b16 %v62
  %v219 = vunpack.c.l.b16 %v63
  %v220 = vunpack.c.h.b16 %v63
  %v221 = vunpack.c.l.b16 %v64
  %v222 = vunpack.c.h.b16 %v64
  %v223 = vunpack.c.l.b16 %v65
  %v224 = vunpack.c.h.b16 %v65
  %v225 = vunpack.c.l.b16 %v66
  %v226 = vunpack.c.h.b16 %v66
  %v227 = vunpack.c.l.b16 %v67
  %v228 = vunpack.c.h.b16 %v67
  %v229 = vunpack.c.l.b16 %v68
  %v230 = vunpack.c.h.b16 %v68
  %v231 = vunpack.c.l.b16 %v69
  %v232 = vunpack.c.h.b16 %v69
  %v233 = vunpack.c.l.b16 %v70
  %v234 = vunpack.c.h.b16 %v70
  %v235 = vunpack.c.l.b16 %v71
  %v236 = vunpack.c.h.b16 %v71
  %v237 = vunpack.c.l.b16 %v72
  %v238 = vunpack.c.h.b16 %v72
  %v239 = vunpack.c.l.b16 %v73
  %v240 = vunpack.c.h.b16 %v73
  %v241 = vunpack.c.l.b16 %v74
  %v242 = vunpack.c.h.b16 %v74
  %v243 = vunpack.c.l.b16 %v75
  %v244 = vunpack.c.h.b16 %v75
  %v245 = vunpack.c.l.b16 %v76
  %v246 = vunpack.c.h.b16 %v76
  %v247 = vunpack.c.l.b16 %v77
  %v248 = vunpack.c.h.b16 %v77
  %v249 = vunpack.c.l.b16 %v78
  %v250 = vunpack.c.h.b16 %v78
  %v251 = vunpack.c.l.b16 %v79
  %v252 = vunpack.c.h.b16 %v79
  %v253 = vunpack.c.l.b16 %v80
  %v254 = vunpack.c.h.b16 %v80
  %v255 = vunpack.c.l.b16 %v81
  %v256 = vunpack.c.h.b16 %v81
  %v257 = vunpack.c.l.b16 %v82
  %v258 = vunpack.c.h.b16 %v82
  %v259 = vunpack.c.l.b16 %v83
  %v260 = vunpack.c.h.b16 %v83
  %v261 = vunpack.c.l.b16 %v84
  %v262 = vunpack.c.h.b16 %v84
  %v263 = vunpack.c.l.b16 %v85
  %v264 = vunpack.c.h.b16 %v85
  %v265 = vunpack.c.l.b16 %v86
  %v266 = vunpack.c.h.b16 %v86
  %v267 = vunpack.c.l.b16 %v87
  %v268 = vunpack.c.h.b16 %v87
  %v269 = vunpack.c.l.b16 %v88
  %v270 = vunpack.c.h.b16 %v88
  %v271 = vunpack.c.l.b16 %v89
  %v272 = vunpack.c.h.b16 %v89
  %v273 = vunpack.c.l.b16 %v90
  %v274 = vunpack.c.h.b16 %v90
  %v275 = vunpack.c.l.b16 %v91
  %v276 = vunpack.c.h.b16 %v91
  %v277 = vunpack.c.l.b16 %v92
  %v278 = vunpack.c.h.b16 %v92
  %v279 = vunpack.c.l.b16 %v93
  %v280 = vunpack.c.h.b16 %v93
  %v281 = vunpack.c.l.b16 %v94
  %v282 = vunpack.c.h.b16 %v94
  %v283 = vunpack.c.l.b16 %v95
  %v284 = vunpack.c.h.b16 %v95
  %v285 = vunpack.c.l.b16 %v96
  %v286 = vunpack.c.h.b16 %v96
  %v287 = vunpack.c.l.b16 %v97
  %v288 = vunpack.c.h.b16 %v97
  %v289 = vunpack.c.l.b16 %v98
  %v290 = vunpack.c.h.b16 %v98
  %v291 = vunpack.c.l.b16 %v99
  %v292 = vunpack.c.h.b16 %v99
  %v293 = vunpack.c.l.b16 %v100
  %v294 = vunpack.c.h.b16 %v100
  %v295 = vunpack.c.l.b16 %v101
  %v296 = vunpack.c.h.b16 %v101
  %v297 = vunpack.c.l.b16 %v102
  %v298 = vunpack.c.h.b16 %v102
  %v299 = vunpack.c.l.b16 %v103
  %v300 = vunpack.c.h.b16 %v103
  %v301 = vunpack.c.l.b16 %v104
  %v302 = vunpack.c.h.b16 %v104
  %v303 = vunpack.c.l.b16 %v105
  %v304 = vunpack.c.h.b16 %v105
  %v305 = vunpack.c.l.b16 %v106
  %v306 = vunpack.c.h.b16 %v106
  %v307 = vunpack.c.l.b16 %v107
  %v308 = vunpack.c.h.b16 %v107
  %v309 = vunpack.c.l.b16 %v108
  %v310 = vunpack.c.h.b16 %v108
  %v311 = vunpack.c.l.b16 %v109
  %v312 = vunpack.c.h.b16 %v109
  %v313 = vunpack.c.l.b16 %v110
  %v314 = vunpack.c.h.b16 %v110
  %v315 = vunpack.c.l.b16 %v111
  %v316 = vunpack.c.h.b16 %v111
  %v317 = vunpack.c.l.b16 %v112
  %v318 = vunpack.c.h.b16 %v112
  %v319 = vunpack.c.l.b16 %v113
  %v320 = vunpack.c.h.b16 %v113
  %v321 = vunpack.c.l.b16 %v114
  %v322 = vunpack.c.h.b16 %v114
  %v323 = vunpack.c.l.b16 %v115
  %v324 = vunpack.c.h.b16 %v115
  %v325 = vunpack.c.l.b16 %v116
  %v326 = vunpack.c.h.b16 %v116
  %v327 = vunpack.c.l.b16 %v117
  %v328 = vunpack.c.h.b16 %v117
  %v329 = vunpack.c.l.b16 %v118
  %v330 = vunpack.c.h.b16 %v118
  %v331 = vunpack.c.l.b16 %v119
  %v332 = vunpack.c.h.b16 %v119
  %v333 = vunpack.c.l.b16 %v120
  %v334 = vunpack.c.h.b16 %v120
  %v335 = vpack.c.b16 %v211, %v207
  %v336 = vpack.c.b16 %v212, %v208
  %v337 = vpack.c.b16 %v213, %v209
  %v338 = vpack.c.b16 %v214, %v210
  %v339 = vpack.c.b16 %v219, %v215
  %v340 = vpack.c.b16 %v220, %v216
  %v341 = vpack.c.b16 %v221, %v217
  %v342 = vpack.c.b16 %v222, %v218
  %v343 = vpack.c.b16 %v227, %v223
  %v344 = vpack.c.b16 %v228, %v224
  %v345 = vpack.c.b16 %v229, %v225
  %v346 = vpack.c.b16 %v230, %v226
  %v347 = vpack.c.b16 %v235, %v231
  %v348 = vpack.c.b16 %v236, %v232
  %v349 = vpack.c.b16 %v237, %v233
  %v350 = vpack.c.b16 %v238, %v234
  %v351 = vpack.c.b16 %v243, %v239
  %v352 = vpack.c.b16 %v244, %v240
  %v353 = vpack.c.b16 %v245, %v241
  %v354 = vpack.c.b16 %v246, %v242
  %v355 = vpack.c.b16 %v251, %v247
  %v356 = vpack.c.b16 %v252, %v248
  %v357 = vpack.c.b16 %v253, %v249
  %v358 = vpack.c.b16 %v254, %v250
  %v359 = vpack.c.b16 %v259, %v255
  %v360 = vpack.c.b16 %v260, %v256
  %v361 = vpack.c.b16 %v261, %v257
  %v362 = vpack.c.b16 %v262, %v258
  %v363 = vpack.c.b16 %v267, %v263
  %v364 = vpack.c.b16 %v268, %v264
  %v365 = vpack.c.b16 %v269, %v265
  %v366 = vpack.c.b16 %v270, %v266
  %v367 = vpack.c.b16 %v275, %v271
  %v368 = vpack.c.b16 %v276, %v272
  %v369 = vpack.c.b16 %v277, %v273
  %v370 = vpack.c.b16 %v278, %v274
  %v371 = vpack.c.b16 %v283, %v279
  %v372 = vpack.c.b16 %v284, %v280
  %v373 = vpack.c.b16 %v285, %v281
  %v374 = vpack.c.b16 %v286, %v282
  %v375 = vpack.c.b16 %v291, %v287
  %v376 = vpack.c.b16 %v292, %v288
  %v377 = vpack.c.b16 %v293, %v289
  %v378 = vpack.c.b16 %v294, %v290
  %v379 = vpack.c.b16 %v299, %v295
  %v380 = vpack.c.b16 %v300, %v296
  %v381 = vpack.c.b16 %v301, %v297
  %v382 = vpack.c.b16 %v302, %v298
  %v383 = vpack.c.b16 %v307, %v303
  %v384 = vpack.c.b16 %v308, %v304
  %v385 = vpack.c.b16 %v309, %v305
  %v386 = vpack.c.b16 %v310, %v306
  %v387 = vpack.c.b16 %v315, %v311
  %v388 = vpack.c.b16 %v316, %v312
  %v389 = vpack.c.b16 %v317, %v313
  %v390 = vpack.c.b16 %v318, %v314
  %v391 = vpack.c.b16 %v323, %v319
  %v392 = vpack.c.b16 %v324, %v320
  %v393 = vpack.c.b16 %v325, %v321
  %v394 = vpack.c.b16 %v326, %v322
  %v395 = vpack.c.b16 %v331, %v327
  %v396 = vpack.c.b16 %v332, %v328
  %v397 = vpack.c.b16 %v333, %v329
  %v398 = vpack.c.b16 %v334, %v330
  %463 = vmatprep.subr.bf16.mxu0 %v336
  %464 = vmatpush1.bf16.msra.mxu0 %v335
  %465 = vmatprep.subr.bf16.mxu0 %v340
  %466 = vmatpush1.bf16.msra.mxu0 %v339
  %467 = vmatprep.subr.bf16.mxu0 %v344
  %468 = vmatpush1.bf16.msra.mxu0 %v343
  %469 = vmatprep.subr.bf16.mxu0 %v348
  %470 = vmatpush1.bf16.msra.mxu0 %v347
  %471 = vmatprep.subr.bf16.mxu0 %v352
  %472 = vmatpush1.bf16.msra.mxu0 %v351
  %473 = vmatprep.subr.bf16.mxu0 %v356
  %474 = vmatpush1.bf16.msra.mxu0 %v355
  %475 = vmatprep.subr.bf16.mxu0 %v360
  %476 = vmatpush1.bf16.msra.mxu0 %v359
  %477 = vmatprep.subr.bf16.mxu0 %v364
  %478 = vmatpush1.bf16.msra.mxu0 %v363
  %479 = vmatprep.subr.bf16.mxu0 %v368
  %480 = vmatpush1.bf16.msra.mxu0 %v367
  %481 = vmatprep.subr.bf16.mxu0 %v372
  %482 = vmatpush1.bf16.msra.mxu0 %v371
  %483 = vmatprep.subr.bf16.mxu0 %v376
  %484 = vmatpush1.bf16.msra.mxu0 %v375
  %485 = vmatprep.subr.bf16.mxu0 %v380
  %486 = vmatpush1.bf16.msra.mxu0 %v379
  %487 = vmatprep.subr.bf16.mxu0 %v384
  %488 = vmatpush1.bf16.msra.mxu0 %v383
  %489 = vmatprep.subr.bf16.mxu0 %v388
  %490 = vmatpush1.bf16.msra.mxu0 %v387
  %491 = vmatprep.subr.bf16.mxu0 %v392
  %492 = vmatpush1.bf16.msra.mxu0 %v391
  %493 = vmatprep.subr.bf16.mxu0 %v396
  %494 = vmatpush1.bf16.msra.mxu0 %v395
  %495 = vmatprep.mubr.bf16.mxu0 %v50
  %496 = vmatmul.mubr.bf16.gmra.mrb[0].mxu0 %v49
  %v497 = vpop.f32.mrb[0].mxu0
  %v498 = vadd.f32 %v126, %v497
  %v499 = vpop.f32.mrb[0].mxu0
  %v500 = vadd.f32 %v130, %v499
  %v501 = vpop.f32.mrb[0].mxu0
  %v502 = vadd.f32 %v126, %v501
  %v503 = vpop.f32.mrb[0].mxu0
  %v504 = vadd.f32 %v130, %v503
  %505 = vmatprep.mubr.bf16.mxu0 %v52
  %506 = vmatmul.mubr.bf16.gmra.mrb[0].mxu0 %v51
  %v507 = vpop.f32.mrb[0].mxu0
  %v508 = vadd.f32 %v126, %v507
  %v509 = vpop.f32.mrb[0].mxu0
  %v510 = vadd.f32 %v130, %v509
  %v511 = vpop.f32.mrb[0].mxu0
  %v512 = vadd.f32 %v126, %v511
  %v513 = vpop.f32.mrb[0].mxu0
  %v514 = vadd.f32 %v130, %v513
  %515 = vmatprep.mubr.bf16.mxu0 %v54
  %516 = vmatmul.mubr.bf16.gmra.mrb[0].mxu0 %v53
  %v517 = vpop.f32.mrb[0].mxu0
  %v518 = vadd.f32 %v126, %v517
  %v519 = vpop.f32.mrb[0].mxu0
  %v520 = vadd.f32 %v130, %v519
  %v521 = vpop.f32.mrb[0].mxu0
  %v522 = vadd.f32 %v126, %v521
  %v523 = vpop.f32.mrb[0].mxu0
  %v524 = vadd.f32 %v130, %v523
  %525 = vmatprep.mubr.bf16.mxu0 %v56
  %526 = vmatmul.mubr.bf16.gmra.mrb[0].mxu0 %v55
  %v527 = vpop.f32.mrb[0].mxu0
  %v528 = vadd.f32 %v126, %v527
  %v529 = vpop.f32.mrb[0].mxu0
  %v530 = vadd.f32 %v130, %v529
  %v531 = vpop.f32.mrb[0].mxu0
  %v532 = vadd.f32 %v126, %v531
  %v533 = vpop.f32.mrb[0].mxu0
  %v534 = vadd.f32 %v130, %v533
  %535 = vdwg.mxu0
  %536 = vmatprep.subr.bf16.mxu0 %v338
  %537 = vmatpush1.bf16.msra.mxu0 %v337
  %538 = vmatprep.subr.bf16.mxu0 %v342
  %539 = vmatpush1.bf16.msra.mxu0 %v341
  %540 = vmatprep.subr.bf16.mxu0 %v346
  %541 = vmatpush1.bf16.msra.mxu0 %v345
  %542 = vmatprep.subr.bf16.mxu0 %v350
  %543 = vmatpush1.bf16.msra.mxu0 %v349
  %544 = vmatprep.subr.bf16.mxu0 %v354
  %545 = vmatpush1.bf16.msra.mxu0 %v353
  %546 = vmatprep.subr.bf16.mxu0 %v358
  %547 = vmatpush1.bf16.msra.mxu0 %v357
  %548 = vmatprep.subr.bf16.mxu0 %v362
  %549 = vmatpush1.bf16.msra.mxu0 %v361
  %550 = vmatprep.subr.bf16.mxu0 %v366
  %551 = vmatpush1.bf16.msra.mxu0 %v365
  %552 = vmatprep.subr.bf16.mxu0 %v370
  %553 = vmatpush1.bf16.msra.mxu0 %v369
  %554 = vmatprep.subr.bf16.mxu0 %v374
  %555 = vmatpush1.bf16.msra.mxu0 %v373
  %556 = vmatprep.subr.bf16.mxu0 %v378
  %557 = vmatpush1.bf16.msra.mxu0 %v377
  %558 = vmatprep.subr.bf16.mxu0 %v382
  %559 = vmatpush1.bf16.msra.mxu0 %v381
  %560 = vmatprep.subr.bf16.mxu0 %v386
  %561 = vmatpush1.bf16.msra.mxu0 %v385
  %562 = vmatprep.subr.bf16.mxu0 %v390
  %563 = vmatpush1.bf16.msra.mxu0 %v389
  %564 = vmatprep.subr.bf16.mxu0 %v394
  %565 = vmatpush1.bf16.msra.mxu0 %v393
  %566 = vmatprep.subr.bf16.mxu0 %v398
  %567 = vmatpush1.bf16.msra.mxu0 %v397
  %568 = vmatprep.mubr.bf16.mxu0 %v50
  %569 = vmatmul.mubr.bf16.gmra.mrb[0].mxu0 %v49
  %v570 = vpop.f32.mrb[0].mxu0
  %v571 = vadd.f32 %v134, %v570
  %v572 = vpop.f32.mrb[0].mxu0
  %v573 = vadd.f32 %v138, %v572
  %v574 = vpop.f32.mrb[0].mxu0
  %v575 = vadd.f32 %v134, %v574
  %v576 = vpop.f32.mrb[0].mxu0
  %v577 = vadd.f32 %v138, %v576
  %578 = vmatprep.mubr.bf16.mxu0 %v52
  %579 = vmatmul.mubr.bf16.gmra.mrb[0].mxu0 %v51
  %v580 = vpop.f32.mrb[0].mxu0
  %v581 = vadd.f32 %v134, %v580
  %v582 = vpop.f32.mrb[0].mxu0
  %v583 = vadd.f32 %v138, %v582
  %v584 = vpop.f32.mrb[0].mxu0
  %v585 = vadd.f32 %v134, %v584
  %v586 = vpop.f32.mrb[0].mxu0
  %v587 = vadd.f32 %v138, %v586
  %588 = vmatprep.mubr.bf16.mxu0 %v54
  %589 = vmatmul.mubr.bf16.gmra.mrb[0].mxu0 %v53
  %v590 = vpop.f32.mrb[0].mxu0
  %v591 = vadd.f32 %v134, %v590
  %v592 = vpop.f32.mrb[0].mxu0
  %v593 = vadd.f32 %v138, %v592
  %v594 = vpop.f32.mrb[0].mxu0
  %v595 = vadd.f32 %v134, %v594
  %v596 = vpop.f32.mrb[0].mxu0
  %v597 = vadd.f32 %v138, %v596
  %598 = vmatprep.mubr.bf16.mxu0 %v56
  %599 = vmatmul.mubr.bf16.gmra.mrb[0].mxu0 %v55
  %v600 = vpop.f32.mrb[0].mxu0
  %v601 = vadd.f32 %v134, %v600
  %v602 = vpop.f32.mrb[0].mxu0
  %v603 = vadd.f32 %v138, %v602
  %v604 = vpop.f32.mrb[0].mxu0
  %v605 = vadd.f32 %v134, %v604
  %v606 = vpop.f32.mrb[0].mxu0
  %v607 = vadd.f32 %v138, %v606
  %608 = vdwg.mxu0
  %s609 = smul.u32 0, 4
  %s610 = smul.addr %s609, 8
  %s611 = scalar_lea.vmem [#allocation2], %s610
  %612 = vst [vmem:[%s611] sm:$0xff] %v498
  %613 = vst [vmem:[%s611 + $0x8] sm:$0xff] %v500
  %614 = vst [vmem:[%s611 + $0x10] sm:$0xff] %v571
  %615 = vst [vmem:[%s611 + $0x18] sm:$0xff] %v573
  %616 = vst [vmem:[%s611 + $0x20] sm:$0xff] %v502
  %617 = vst [vmem:[%s611 + $0x28] sm:$0xff] %v504
  %618 = vst [vmem:[%s611 + $0x30] sm:$0xff] %v575
  %619 = vst [vmem:[%s611 + $0x38] sm:$0xff] %v577
  %620 = vst [vmem:[%s611 + $0x40] sm:$0xff] %v508
  %621 = vst [vmem:[%s611 + $0x48] sm:$0xff] %v510
  %622 = vst [vmem:[%s611 + $0x50] sm:$0xff] %v581
  %623 = vst [vmem:[%s611 + $0x58] sm:$0xff] %v583
  %624 = vst [vmem:[%s611 + $0x60] sm:$0xff] %v512
  %625 = vst [vmem:[%s611 + $0x68] sm:$0xff] %v514
  %626 = vst [vmem:[%s611 + $0x70] sm:$0xff] %v585
  %627 = vst [vmem:[%s611 + $0x78] sm:$0xff] %v587
  %628 = vst [vmem:[%s611 + $0x80] sm:$0xff] %v518
  %629 = vst [vmem:[%s611 + $0x88] sm:$0xff] %v520
  %630 = vst [vmem:[%s611 + $0x90] sm:$0xff] %v591
  %631 = vst [vmem:[%s611 + $0x98] sm:$0xff] %v593
  %632 = vst [vmem:[%s611 + $0xa0] sm:$0xff] %v522
  %633 = vst [vmem:[%s611 + $0xa8] sm:$0xff] %v524
  %634 = vst [vmem:[%s611 + $0xb0] sm:$0xff] %v595
  %635 = vst [vmem:[%s611 + $0xb8] sm:$0xff] %v597
  %636 = vst [vmem:[%s611 + $0xc0] sm:$0xff] %v528
  %637 = vst [vmem:[%s611 + $0xc8] sm:$0xff] %v530
  %638 = vst [vmem:[%s611 + $0xd0] sm:$0xff] %v601
  %639 = vst [vmem:[%s611 + $0xd8] sm:$0xff] %v603
  %640 = vst [vmem:[%s611 + $0xe0] sm:$0xff] %v532
  %641 = vst [vmem:[%s611 + $0xe8] sm:$0xff] %v534
  %642 = vst [vmem:[%s611 + $0xf0] sm:$0xff] %v605
  %643 = vst [vmem:[%s611 + $0xf8] sm:$0xff] %v607
  %p644 = scmp.eq.s32.totalorder 0, 0
  // Predicated region
  $region34: #{fall_lstm_forward.1} parent=0 // pred_check
    %p645 = pneg %p644
  $region35: #{fall_lstm_forward.1} parent=0 // pred_check_branch
    %647 = sbr.rel (%p645) target = $region37
  $region36: #{fall_lstm_forward.1} parent=0 // pred_region
    %648 = vst [vmem:[#allocation3] sm:$0xff] 0.0
    %649 = vst [vmem:[#allocation4] sm:$0xff] 0.0
    %v650 = vld [vmem:[#allocation2] sm:$0xff]
    %v651 = vld [vmem:[#allocation2 + $0x8] sm:$0xff]
    %v652 = vld [vmem:[#allocation2 + $0x10] sm:$0xff]
    %v653 = vld [vmem:[#allocation2 + $0x18] sm:$0xff]
    %v654 = vlaneseq
    %v655 = vand.u32 %v654, 127
    %v656 = vadd.s32 %v655, 128
    %v657 = vadd.s32 %v655, 256
    %v658 = vadd.s32 %v655, 384
    %vm659 = vcmp.ge.s32.totalorder %v655, 64
    %vm660 = vcmp.ge.s32.totalorder %v656, 64
    %vm661 = vcmp.ge.s32.totalorder %v657, 64
    %vm662 = vcmp.ge.s32.totalorder %v658, 64
    %vm663 = vcmp.lt.s32.totalorder %v655, 128
    %vm664 = vcmp.lt.s32.totalorder %v656, 128
    %vm665 = vcmp.lt.s32.totalorder %v657, 128
    %vm666 = vcmp.lt.s32.totalorder %v658, 128
    %vm667 = vmand %vm659, %vm663
    %vm668 = vmand %vm660, %vm664
    %vm669 = vmand %vm661, %vm665
    %vm670 = vmand %vm662, %vm666
    %v671 = vsel %vm667, -1e+30, %v650
    %v672 = vsel %vm668, -1e+30, %v651
    %v673 = vsel %vm669, -1e+30, %v652
    %v674 = vsel %vm670, -1e+30, %v653
    %675 = vst [vmem:[#allocation2] sm:$0xff] %v671
    %676 = vst [vmem:[#allocation2 + $0x8] sm:$0xff] %v672
    %677 = vst [vmem:[#allocation2 + $0x10] sm:$0xff] %v673
    %678 = vst [vmem:[#allocation2 + $0x18] sm:$0xff] %v674
  $region37: #{fall_lstm_forward.1} parent=0 // pred_fallthru
    _
  %v679 = vld [vmem:[#allocation3] sm:$0xff]
  %v680 = vld [vmem:[#allocation4] sm:$0xff]
  %s681 = smul.u32 0, 4
  %s682 = smul.addr %s681, 8
  %s683 = scalar_lea.vmem [#allocation2], %s682
  %v684 = vld [vmem:[%s683] sm:$0xff]
  %v685 = vld [vmem:[%s683 + $0x8] sm:$0xff]
  %v686 = vld [vmem:[%s683 + $0x10] sm:$0xff]
  %v687 = vld [vmem:[%s683 + $0x18] sm:$0xff]
  %v688 = vpack.c.bf16 %v679, %v679
  %v689 = vld [vmem:[%s3] sm:$0xff]
  %v690 = vld [vmem:[%s3 + $0x8] sm:$0xff]
  %v691 = vld [vmem:[%s3 + $0x10] sm:$0xff]
  %v692 = vld [vmem:[%s3 + $0x18] sm:$0xff]
  %v693 = vld [vmem:[%s3 + $0x20] sm:$0xff]
  %v694 = vld [vmem:[%s3 + $0x28] sm:$0xff]
  %v695 = vld [vmem:[%s3 + $0x30] sm:$0xff]
  %v696 = vld [vmem:[%s3 + $0x38] sm:$0xff]
  %v697 = vld [vmem:[%s3 + $0x40] sm:$0xff]
  %v698 = vld [vmem:[%s3 + $0x48] sm:$0xff]
  %v699 = vld [vmem:[%s3 + $0x50] sm:$0xff]
  %v700 = vld [vmem:[%s3 + $0x58] sm:$0xff]
  %v701 = vld [vmem:[%s3 + $0x60] sm:$0xff]
  %v702 = vld [vmem:[%s3 + $0x68] sm:$0xff]
  %v703 = vld [vmem:[%s3 + $0x70] sm:$0xff]
  %v704 = vld [vmem:[%s3 + $0x78] sm:$0xff]
  %v705 = vld [vmem:[%s3 + $0x80] sm:$0xff]
  %v706 = vld [vmem:[%s3 + $0x88] sm:$0xff]
  %v707 = vld [vmem:[%s3 + $0x90] sm:$0xff]
  %v708 = vld [vmem:[%s3 + $0x98] sm:$0xff]
  %v709 = vld [vmem:[%s3 + $0xa0] sm:$0xff]
  %v710 = vld [vmem:[%s3 + $0xa8] sm:$0xff]
  %v711 = vld [vmem:[%s3 + $0xb0] sm:$0xff]
  %v712 = vld [vmem:[%s3 + $0xb8] sm:$0xff]
  %v713 = vld [vmem:[%s3 + $0xc0] sm:$0xff]
  %v714 = vld [vmem:[%s3 + $0xc8] sm:$0xff]
  %v715 = vld [vmem:[%s3 + $0xd0] sm:$0xff]
  %v716 = vld [vmem:[%s3 + $0xd8] sm:$0xff]
  %v717 = vld [vmem:[%s3 + $0xe0] sm:$0xff]
  %v718 = vld [vmem:[%s3 + $0xe8] sm:$0xff]
  %v719 = vld [vmem:[%s3 + $0xf0] sm:$0xff]
  %v720 = vld [vmem:[%s3 + $0xf8] sm:$0xff]
  %v753 = vunpack.c.l.b16 %v689
  %v754 = vunpack.c.h.b16 %v689
  %v755 = vunpack.c.l.b16 %v690
  %v756 = vunpack.c.h.b16 %v690
  %v757 = vunpack.c.l.b16 %v691
  %v758 = vunpack.c.h.b16 %v691
  %v759 = vunpack.c.l.b16 %v692
  %v760 = vunpack.c.h.b16 %v692
  %v761 = vunpack.c.l.b16 %v693
  %v762 = vunpack.c.h.b16 %v693
  %v763 = vunpack.c.l.b16 %v694
  %v764 = vunpack.c.h.b16 %v694
  %v765 = vunpack.c.l.b16 %v695
  %v766 = vunpack.c.h.b16 %v695
  %v767 = vunpack.c.l.b16 %v696
  %v768 = vunpack.c.h.b16 %v696
  %v769 = vunpack.c.l.b16 %v697
  %v770 = vunpack.c.h.b16 %v697
  %v771 = vunpack.c.l.b16 %v698
  %v772 = vunpack.c.h.b16 %v698
  %v773 = vunpack.c.l.b16 %v699
  %v774 = vunpack.c.h.b16 %v699
  %v775 = vunpack.c.l.b16 %v700
  %v776 = vunpack.c.h.b16 %v700
  %v777 = vunpack.c.l.b16 %v701
  %v778 = vunpack.c.h.b16 %v701
  %v779 = vunpack.c.l.b16 %v702
  %v780 = vunpack.c.h.b16 %v702
  %v781 = vunpack.c.l.b16 %v703
  %v782 = vunpack.c.h.b16 %v703
  %v783 = vunpack.c.l.b16 %v704
  %v784 = vunpack.c.h.b16 %v704
  %v785 = vunpack.c.l.b16 %v705
  %v786 = vunpack.c.h.b16 %v705
  %v787 = vunpack.c.l.b16 %v706
  %v788 = vunpack.c.h.b16 %v706
  %v789 = vunpack.c.l.b16 %v707
  %v790 = vunpack.c.h.b16 %v707
  %v791 = vunpack.c.l.b16 %v708
  %v792 = vunpack.c.h.b16 %v708
  %v793 = vunpack.c.l.b16 %v709
  %v794 = vunpack.c.h.b16 %v709
  %v795 = vunpack.c.l.b16 %v710
  %v796 = vunpack.c.h.b16 %v710
  %v797 = vunpack.c.l.b16 %v711
  %v798 = vunpack.c.h.b16 %v711
  %v799 = vunpack.c.l.b16 %v712
  %v800 = vunpack.c.h.b16 %v712
  %v801 = vunpack.c.l.b16 %v713
  %v802 = vunpack.c.h.b16 %v713
  %v803 = vunpack.c.l.b16 %v714
  %v804 = vunpack.c.h.b16 %v714
  %v805 = vunpack.c.l.b16 %v715
  %v806 = vunpack.c.h.b16 %v715
  %v807 = vunpack.c.l.b16 %v716
  %v808 = vunpack.c.h.b16 %v716
  %v809 = vunpack.c.l.b16 %v717
  %v810 = vunpack.c.h.b16 %v717
  %v811 = vunpack.c.l.b16 %v718
  %v812 = vunpack.c.h.b16 %v718
  %v813 = vunpack.c.l.b16 %v719
  %v814 = vunpack.c.h.b16 %v719
  %v815 = vunpack.c.l.b16 %v720
  %v816 = vunpack.c.h.b16 %v720
  %v817 = vpack.c.b16 %v757, %v753
  %v818 = vpack.c.b16 %v758, %v754
  %v819 = vpack.c.b16 %v759, %v755
  %v820 = vpack.c.b16 %v760, %v756
  %v821 = vpack.c.b16 %v765, %v761
  %v822 = vpack.c.b16 %v766, %v762
  %v823 = vpack.c.b16 %v767, %v763
  %v824 = vpack.c.b16 %v768, %v764
  %v825 = vpack.c.b16 %v773, %v769
  %v826 = vpack.c.b16 %v774, %v770
  %v827 = vpack.c.b16 %v775, %v771
  %v828 = vpack.c.b16 %v776, %v772
  %v829 = vpack.c.b16 %v781, %v777
  %v830 = vpack.c.b16 %v782, %v778
  %v831 = vpack.c.b16 %v783, %v779
  %v832 = vpack.c.b16 %v784, %v780
  %v833 = vpack.c.b16 %v789, %v785
  %v834 = vpack.c.b16 %v790, %v786
  %v835 = vpack.c.b16 %v791, %v787
  %v836 = vpack.c.b16 %v792, %v788
  %v837 = vpack.c.b16 %v797, %v793
  %v838 = vpack.c.b16 %v798, %v794
  %v839 = vpack.c.b16 %v799, %v795
  %v840 = vpack.c.b16 %v800, %v796
  %v841 = vpack.c.b16 %v805, %v801
  %v842 = vpack.c.b16 %v806, %v802
  %v843 = vpack.c.b16 %v807, %v803
  %v844 = vpack.c.b16 %v808, %v804
  %v845 = vpack.c.b16 %v813, %v809
  %v846 = vpack.c.b16 %v814, %v810
  %v847 = vpack.c.b16 %v815, %v811
  %v848 = vpack.c.b16 %v816, %v812
  %881 = vmatprep.subr.bf16.mxu0 %v818
  %882 = vmatpush1.bf16.msra.mxu0 %v817
  %883 = vmatprep.subr.bf16.mxu0 %v822
  %884 = vmatpush1.bf16.msra.mxu0 %v821
  %885 = vmatprep.subr.bf16.mxu0 %v826
  %886 = vmatpush1.bf16.msra.mxu0 %v825
  %887 = vmatprep.subr.bf16.mxu0 %v830
  %888 = vmatpush1.bf16.msra.mxu0 %v829
  %889 = vmatprep.subr.bf16.mxu0 %v834
  %890 = vmatpush1.bf16.msra.mxu0 %v833
  %891 = vmatprep.subr.bf16.mxu0 %v838
  %892 = vmatpush1.bf16.msra.mxu0 %v837
  %893 = vmatprep.subr.bf16.mxu0 %v842
  %894 = vmatpush1.bf16.msra.mxu0 %v841
  %895 = vmatprep.subr.bf16.mxu0 %v846
  %896 = vmatpush1.bf16.msra.mxu0 %v845
  %897 = vmatprep.subr.bf16.mxu0 0
  %898 = vmatpush1.bf16.msra.mxu0 0
  %899 = vmatprep.subr.bf16.mxu0 0
  %900 = vmatpush1.bf16.msra.mxu0 0
  %901 = vmatprep.subr.bf16.mxu0 0
  %902 = vmatpush1.bf16.msra.mxu0 0
  %903 = vmatprep.subr.bf16.mxu0 0
  %904 = vmatpush1.bf16.msra.mxu0 0
  %905 = vmatprep.subr.bf16.mxu0 0
  %906 = vmatpush1.bf16.msra.mxu0 0
  %907 = vmatprep.subr.bf16.mxu0 0
  %908 = vmatpush1.bf16.msra.mxu0 0
  %909 = vmatprep.subr.bf16.mxu0 0
  %910 = vmatpush1.bf16.msra.mxu0 0
  %911 = vmatprep.subr.bf16.mxu0 0
  %912 = vmatpush1.bf16.msra.mxu0 0
  %913 = vmatprep.mubr.bf16.mxu0 0
  %914 = vmatmul.mubr.bf16.gmra.mrb[0].mxu0 %v688
  %v915 = vpop.f32.mrb[0].mxu0
  %v916 = vadd.f32 0.0, %v915
  %v917 = vpop.f32.mrb[0].mxu0
  %v918 = vadd.f32 0.0, %v917
  %v919 = vpop.f32.mrb[0].mxu0
  %v920 = vpop.f32.mrb[0].mxu0
  %921 = vdwg.mxu0
  %922 = vmatprep.subr.bf16.mxu0 %v820
  %923 = vmatpush1.bf16.msra.mxu0 %v819
  %924 = vmatprep.subr.bf16.mxu0 %v824
  %925 = vmatpush1.bf16.msra.mxu0 %v823
  %926 = vmatprep.subr.bf16.mxu0 %v828
  %927 = vmatpush1.bf16.msra.mxu0 %v827
  %928 = vmatprep.subr.bf16.mxu0 %v832
  %929 = vmatpush1.bf16.msra.mxu0 %v831
  %930 = vmatprep.subr.bf16.mxu0 %v836
  %931 = vmatpush1.bf16.msra.mxu0 %v835
  %932 = vmatprep.subr.bf16.mxu0 %v840
  %933 = vmatpush1.bf16.msra.mxu0 %v839
  %934 = vmatprep.subr.bf16.mxu0 %v844
  %935 = vmatpush1.bf16.msra.mxu0 %v843
  %936 = vmatprep.subr.bf16.mxu0 %v848
  %937 = vmatpush1.bf16.msra.mxu0 %v847
  %938 = vmatprep.subr.bf16.mxu0 0
  %939 = vmatpush1.bf16.msra.mxu0 0
  %940 = vmatprep.subr.bf16.mxu0 0
  %941 = vmatpush1.bf16.msra.mxu0 0
  %942 = vmatprep.subr.bf16.mxu0 0
  %943 = vmatpush1.bf16.msra.mxu0 0
  %944 = vmatprep.subr.bf16.mxu0 0
  %945 = vmatpush1.bf16.msra.mxu0 0
  %946 = vmatprep.subr.bf16.mxu0 0
  %947 = vmatpush1.bf16.msra.mxu0 0
  %948 = vmatprep.subr.bf16.mxu0 0
  %949 = vmatpush1.bf16.msra.mxu0 0
  %950 = vmatprep.subr.bf16.mxu0 0
  %951 = vmatpush1.bf16.msra.mxu0 0
  %952 = vmatprep.subr.bf16.mxu0 0
  %953 = vmatpush1.bf16.msra.mxu0 0
  %954 = vmatprep.mubr.bf16.mxu0 0
  %955 = vmatmul.mubr.bf16.gmra.mrb[0].mxu0 %v688
  %v956 = vpop.f32.mrb[0].mxu0
  %v957 = vadd.f32 0.0, %v956
  %v958 = vpop.f32.mrb[0].mxu0
  %v959 = vadd.f32 0.0, %v958
  %v960 = vpop.f32.mrb[0].mxu0
  %v961 = vpop.f32.mrb[0].mxu0
  %962 = vdwg.mxu0
  %v963 = vadd.f32 %v684, %v916
  %v964 = vadd.f32 %v685, %v918
  %v965 = vadd.f32 %v686, %v957
  %v966 = vadd.f32 %v687, %v959
  %v967 = vmul.f32 %v963, 0.5
  %v968 = vmul.f32 %v964, 0.5
  %v969 = vmul.f32 %v965, 0.5
  %v970 = vtanh.pop %v967
  %v971 = vtanh.pop %v968
  %v972 = vtanh.pop %v969
  %v973 = vmul.f32 %v970, 0.5
  %v974 = vmul.f32 %v971, 0.5
  %v975 = vmul.f32 %v972, 0.5
  %v976 = vadd.f32 %v973, 0.5
  %v977 = vadd.f32 %v974, 0.5
  %v978 = vadd.f32 %v975, 0.5
  %v979 = vtanh.pop %v966
  %v980 = vmul.f32 %v977, %v680
  %v981 = vmul.f32 %v976, %v979
  %v982 = vadd.f32 %v980, %v981
  %v983 = vtanh.pop %v982
  %v984 = vmul.f32 %v978, %v983
  %s985 = smul.u32 1, 4
  %s986 = smul.addr %s985, 8
  %s987 = scalar_lea.vmem [#allocation2], %s986
  %v988 = vld [vmem:[%s987] sm:$0xff]
  %v989 = vld [vmem:[%s987 + $0x8] sm:$0xff]
  %v990 = vld [vmem:[%s987 + $0x10] sm:$0xff]
  %v991 = vld [vmem:[%s987 + $0x18] sm:$0xff]
  %v992 = vpack.c.bf16 %v984, %v984
  %993 = vmatprep.subr.bf16.mxu0 %v818
  %994 = vmatpush1.bf16.msra.mxu0 %v817
  %995 = vmatprep.subr.bf16.mxu0 %v822
  %996 = vmatpush1.bf16.msra.mxu0 %v821
  %997 = vmatprep.subr.bf16.mxu0 %v826
  %998 = vmatpush1.bf16.msra.mxu0 %v825
  %999 = vmatprep.subr.bf16.mxu0 %v830
  %1000 = vmatpush1.bf16.msra.mxu0 %v829
  %1001 = vmatprep.subr.bf16.mxu0 %v834
  %1002 = vmatpush1.bf16.msra.mxu0 %v833
  %1003 = vmatprep.subr.bf16.mxu0 %v838
  %1004 = vmatpush1.bf16.msra.mxu0 %v837
  %1005 = vmatprep.subr.bf16.mxu0 %v842
  %1006 = vmatpush1.bf16.msra.mxu0 %v841
  %1007 = vmatprep.subr.bf16.mxu0 %v846
  %1008 = vmatpush1.bf16.msra.mxu0 %v845
  %1009 = vmatprep.subr.bf16.mxu0 0
  %1010 = vmatpush1.bf16.msra.mxu0 0
  %1011 = vmatprep.subr.bf16.mxu0 0
  %1012 = vmatpush1.bf16.msra.mxu0 0
  %1013 = vmatprep.subr.bf16.mxu0 0
  %1014 = vmatpush1.bf16.msra.mxu0 0
  %1015 = vmatprep.subr.bf16.mxu0 0
  %1016 = vmatpush1.bf16.msra.mxu0 0
  %1017 = vmatprep.subr.bf16.mxu0 0
  %1018 = vmatpush1.bf16.msra.mxu0 0
  %1019 = vmatprep.subr.bf16.mxu0 0
  %1020 = vmatpush1.bf16.msra.mxu0 0
  %1021 = vmatprep.subr.bf16.mxu0 0
  %1022 = vmatpush1.bf16.msra.mxu0 0
  %1023 = vmatprep.subr.bf16.mxu0 0
  %1024 = vmatpush1.bf16.msra.mxu0 0
  %1025 = vmatprep.mubr.bf16.mxu0 0
  %1026 = vmatmul.mubr.bf16.gmra.mrb[0].mxu0 %v992
  %v1027 = vpop.f32.mrb[0].mxu0
  %v1028 = vadd.f32 0.0, %v1027
  %v1029 = vpop.f32.mrb[0].mxu0
  %v1030 = vadd.f32 0.0, %v1029
  %v1031 = vpop.f32.mrb[0].mxu0
  %v1032 = vpop.f32.mrb[0].mxu0
  %1033 = vdwg.mxu0
  %1034 = vmatprep.subr.bf16.mxu0 %v820
  %1035 = vmatpush1.bf16.msra.mxu0 %v819
  %1036 = vmatprep.subr.bf16.mxu0 %v824
  %1037 = vmatpush1.bf16.msra.mxu0 %v823
  %1038 = vmatprep.subr.bf16.mxu0 %v828
  %1039 = vmatpush1.bf16.msra.mxu0 %v827
  %1040 = vmatprep.subr.bf16.mxu0 %v832
  %1041 = vmatpush1.bf16.msra.mxu0 %v831
  %1042 = vmatprep.subr.bf16.mxu0 %v836
  %1043 = vmatpush1.bf16.msra.mxu0 %v835
  %1044 = vmatprep.subr.bf16.mxu0 %v840
  %1045 = vmatpush1.bf16.msra.mxu0 %v839
  %1046 = vmatprep.subr.bf16.mxu0 %v844
  %1047 = vmatpush1.bf16.msra.mxu0 %v843
  %1048 = vmatprep.subr.bf16.mxu0 %v848
  %1049 = vmatpush1.bf16.msra.mxu0 %v847
  %1050 = vmatprep.subr.bf16.mxu0 0
  %1051 = vmatpush1.bf16.msra.mxu0 0
  %1052 = vmatprep.subr.bf16.mxu0 0
  %1053 = vmatpush1.bf16.msra.mxu0 0
  %1054 = vmatprep.subr.bf16.mxu0 0
  %1055 = vmatpush1.bf16.msra.mxu0 0
  %1056 = vmatprep.subr.bf16.mxu0 0
  %1057 = vmatpush1.bf16.msra.mxu0 0
  %1058 = vmatprep.subr.bf16.mxu0 0
  %1059 = vmatpush1.bf16.msra.mxu0 0
  %1060 = vmatprep.subr.bf16.mxu0 0
  %1061 = vmatpush1.bf16.msra.mxu0 0
  %1062 = vmatprep.subr.bf16.mxu0 0
  %1063 = vmatpush1.bf16.msra.mxu0 0
  %1064 = vmatprep.subr.bf16.mxu0 0
  %1065 = vmatpush1.bf16.msra.mxu0 0
  %1066 = vmatprep.mubr.bf16.mxu0 0
  %1067 = vmatmul.mubr.bf16.gmra.mrb[0].mxu0 %v992
  %v1068 = vpop.f32.mrb[0].mxu0
  %v1069 = vadd.f32 0.0, %v1068
  %v1070 = vpop.f32.mrb[0].mxu0
  %v1071 = vadd.f32 0.0, %v1070
  %v1072 = vpop.f32.mrb[0].mxu0
  %v1073 = vpop.f32.mrb[0].mxu0
  %1074 = vdwg.mxu0
  %v1075 = vadd.f32 %v988, %v1028
  %v1076 = vadd.f32 %v989, %v1030
  %v1077 = vadd.f32 %v990, %v1069
  %v1078 = vadd.f32 %v991, %v1071
  %v1079 = vmul.f32 %v1075, 0.5
  %v1080 = vmul.f32 %v1076, 0.5
  %v1081 = vmul.f32 %v1077, 0.5
  %v1082 = vtanh.pop %v1079
  %v1083 = vtanh.pop %v1080
  %v1084 = vtanh.pop %v1081
  %v1085 = vmul.f32 %v1082, 0.5
  %v1086 = vmul.f32 %v1083, 0.5
  %v1087 = vmul.f32 %v1084, 0.5
  %v1088 = vadd.f32 %v1085, 0.5
  %v1089 = vadd.f32 %v1086, 0.5
  %v1090 = vadd.f32 %v1087, 0.5
  %v1091 = vtanh.pop %v1078
  %v1092 = vmul.f32 %v1089, %v982
  %v1093 = vmul.f32 %v1088, %v1091
  %v1094 = vadd.f32 %v1092, %v1093
  %v1095 = vtanh.pop %v1094
  %v1096 = vmul.f32 %v1090, %v1095
  %s1097 = smul.u32 2, 4
  %s1098 = smul.addr %s1097, 8
  %s1099 = scalar_lea.vmem [#allocation2], %s1098
  %v1100 = vld [vmem:[%s1099] sm:$0xff]
  %v1101 = vld [vmem:[%s1099 + $0x8] sm:$0xff]
  %v1102 = vld [vmem:[%s1099 + $0x10] sm:$0xff]
  %v1103 = vld [vmem:[%s1099 + $0x18] sm:$0xff]
  %v1104 = vpack.c.bf16 %v1096, %v1096
  %1105 = vmatprep.subr.bf16.mxu0 %v818
  %1106 = vmatpush1.bf16.msra.mxu0 %v817
  %1107 = vmatprep.subr.bf16.mxu0 %v822
  %1108 = vmatpush1.bf16.msra.mxu0 %v821
  %1109 = vmatprep.subr.bf16.mxu0 %v826
  %1110 = vmatpush1.bf16.msra.mxu0 %v825
  %1111 = vmatprep.subr.bf16.mxu0 %v830
  %1112 = vmatpush1.bf16.msra.mxu0 %v829
  %1113 = vmatprep.subr.bf16.mxu0 %v834
  %1114 = vmatpush1.bf16.msra.mxu0 %v833
  %1115 = vmatprep.subr.bf16.mxu0 %v838
  %1116 = vmatpush1.bf16.msra.mxu0 %v837
  %1117 = vmatprep.subr.bf16.mxu0 %v842
  %1118 = vmatpush1.bf16.msra.mxu0 %v841
  %1119 = vmatprep.subr.bf16.mxu0 %v846
  %1120 = vmatpush1.bf16.msra.mxu0 %v845
  %1121 = vmatprep.subr.bf16.mxu0 0
  %1122 = vmatpush1.bf16.msra.mxu0 0
  %1123 = vmatprep.subr.bf16.mxu0 0
  %1124 = vmatpush1.bf16.msra.mxu0 0
  %1125 = vmatprep.subr.bf16.mxu0 0
  %1126 = vmatpush1.bf16.msra.mxu0 0
  %1127 = vmatprep.subr.bf16.mxu0 0
  %1128 = vmatpush1.bf16.msra.mxu0 0
  %1129 = vmatprep.subr.bf16.mxu0 0
  %1130 = vmatpush1.bf16.msra.mxu0 0
  %1131 = vmatprep.subr.bf16.mxu0 0
  %1132 = vmatpush1.bf16.msra.mxu0 0
  %1133 = vmatprep.subr.bf16.mxu0 0
  %1134 = vmatpush1.bf16.msra.mxu0 0
  %1135 = vmatprep.subr.bf16.mxu0 0
  %1136 = vmatpush1.bf16.msra.mxu0 0
  %1137 = vmatprep.mubr.bf16.mxu0 0
  %1138 = vmatmul.mubr.bf16.gmra.mrb[0].mxu0 %v1104
  %v1139 = vpop.f32.mrb[0].mxu0
  %v1140 = vadd.f32 0.0, %v1139
  %v1141 = vpop.f32.mrb[0].mxu0
  %v1142 = vadd.f32 0.0, %v1141
  %v1143 = vpop.f32.mrb[0].mxu0
  %v1144 = vpop.f32.mrb[0].mxu0
  %1145 = vdwg.mxu0
  %1146 = vmatprep.subr.bf16.mxu0 %v820
  %1147 = vmatpush1.bf16.msra.mxu0 %v819
  %1148 = vmatprep.subr.bf16.mxu0 %v824
  %1149 = vmatpush1.bf16.msra.mxu0 %v823
  %1150 = vmatprep.subr.bf16.mxu0 %v828
  %1151 = vmatpush1.bf16.msra.mxu0 %v827
  %1152 = vmatprep.subr.bf16.mxu0 %v832
  %1153 = vmatpush1.bf16.msra.mxu0 %v831
  %1154 = vmatprep.subr.bf16.mxu0 %v836
  %1155 = vmatpush1.bf16.msra.mxu0 %v835
  %1156 = vmatprep.subr.bf16.mxu0 %v840
  %1157 = vmatpush1.bf16.msra.mxu0 %v839
  %1158 = vmatprep.subr.bf16.mxu0 %v844
  %1159 = vmatpush1.bf16.msra.mxu0 %v843
  %1160 = vmatprep.subr.bf16.mxu0 %v848
  %1161 = vmatpush1.bf16.msra.mxu0 %v847
  %1162 = vmatprep.subr.bf16.mxu0 0
  %1163 = vmatpush1.bf16.msra.mxu0 0
  %1164 = vmatprep.subr.bf16.mxu0 0
  %1165 = vmatpush1.bf16.msra.mxu0 0
  %1166 = vmatprep.subr.bf16.mxu0 0
  %1167 = vmatpush1.bf16.msra.mxu0 0
  %1168 = vmatprep.subr.bf16.mxu0 0
  %1169 = vmatpush1.bf16.msra.mxu0 0
  %1170 = vmatprep.subr.bf16.mxu0 0
  %1171 = vmatpush1.bf16.msra.mxu0 0
  %1172 = vmatprep.subr.bf16.mxu0 0
  %1173 = vmatpush1.bf16.msra.mxu0 0
  %1174 = vmatprep.subr.bf16.mxu0 0
  %1175 = vmatpush1.bf16.msra.mxu0 0
  %1176 = vmatprep.subr.bf16.mxu0 0
  %1177 = vmatpush1.bf16.msra.mxu0 0
  %1178 = vmatprep.mubr.bf16.mxu0 0
  %1179 = vmatmul.mubr.bf16.gmra.mrb[0].mxu0 %v1104
  %v1180 = vpop.f32.mrb[0].mxu0
  %v1181 = vadd.f32 0.0, %v1180
  %v1182 = vpop.f32.mrb[0].mxu0
  %v1183 = vadd.f32 0.0, %v1182
  %v1184 = vpop.f32.mrb[0].mxu0
  %v1185 = vpop.f32.mrb[0].mxu0
  %1186 = vdwg.mxu0
  %v1187 = vadd.f32 %v1100, %v1140
  %v1188 = vadd.f32 %v1101, %v1142
  %v1189 = vadd.f32 %v1102, %v1181
  %v1190 = vadd.f32 %v1103, %v1183
  %v1191 = vmul.f32 %v1187, 0.5
  %v1192 = vmul.f32 %v1188, 0.5
  %v1193 = vmul.f32 %v1189, 0.5
  %v1194 = vtanh.pop %v1191
  %v1195 = vtanh.pop %v1192
  %v1196 = vtanh.pop %v1193
  %v1197 = vmul.f32 %v1194, 0.5
  %v1198 = vmul.f32 %v1195, 0.5
  %v1199 = vmul.f32 %v1196, 0.5
  %v1200 = vadd.f32 %v1197, 0.5
  %v1201 = vadd.f32 %v1198, 0.5
  %v1202 = vadd.f32 %v1199, 0.5
  %v1203 = vtanh.pop %v1190
  %v1204 = vmul.f32 %v1201, %v1094
  %v1205 = vmul.f32 %v1200, %v1203
  %v1206 = vadd.f32 %v1204, %v1205
  %v1207 = vtanh.pop %v1206
  %v1208 = vmul.f32 %v1202, %v1207
  %s1209 = smul.u32 3, 4
  %s1210 = smul.addr %s1209, 8
  %s1211 = scalar_lea.vmem [#allocation2], %s1210
  %v1212 = vld [vmem:[%s1211] sm:$0xff]
  %v1213 = vld [vmem:[%s1211 + $0x8] sm:$0xff]
  %v1214 = vld [vmem:[%s1211 + $0x10] sm:$0xff]
  %v1215 = vld [vmem:[%s1211 + $0x18] sm:$0xff]
  %v1216 = vpack.c.bf16 %v1208, %v1208
  %1217 = vmatprep.subr.bf16.mxu0 %v818
  %1218 = vmatpush1.bf16.msra.mxu0 %v817
  %1219 = vmatprep.subr.bf16.mxu0 %v822
  %1220 = vmatpush1.bf16.msra.mxu0 %v821
  %1221 = vmatprep.subr.bf16.mxu0 %v826
  %1222 = vmatpush1.bf16.msra.mxu0 %v825
  %1223 = vmatprep.subr.bf16.mxu0 %v830
  %1224 = vmatpush1.bf16.msra.mxu0 %v829
  %1225 = vmatprep.subr.bf16.mxu0 %v834
  %1226 = vmatpush1.bf16.msra.mxu0 %v833
  %1227 = vmatprep.subr.bf16.mxu0 %v838
  %1228 = vmatpush1.bf16.msra.mxu0 %v837
  %1229 = vmatprep.subr.bf16.mxu0 %v842
  %1230 = vmatpush1.bf16.msra.mxu0 %v841
  %1231 = vmatprep.subr.bf16.mxu0 %v846
  %1232 = vmatpush1.bf16.msra.mxu0 %v845
  %1233 = vmatprep.subr.bf16.mxu0 0
  %1234 = vmatpush1.bf16.msra.mxu0 0
  %1235 = vmatprep.subr.bf16.mxu0 0
  %1236 = vmatpush1.bf16.msra.mxu0 0
  %1237 = vmatprep.subr.bf16.mxu0 0
  %1238 = vmatpush1.bf16.msra.mxu0 0
  %1239 = vmatprep.subr.bf16.mxu0 0
  %1240 = vmatpush1.bf16.msra.mxu0 0
  %1241 = vmatprep.subr.bf16.mxu0 0
  %1242 = vmatpush1.bf16.msra.mxu0 0
  %1243 = vmatprep.subr.bf16.mxu0 0
  %1244 = vmatpush1.bf16.msra.mxu0 0
  %1245 = vmatprep.subr.bf16.mxu0 0
  %1246 = vmatpush1.bf16.msra.mxu0 0
  %1247 = vmatprep.subr.bf16.mxu0 0
  %1248 = vmatpush1.bf16.msra.mxu0 0
  %1249 = vmatprep.mubr.bf16.mxu0 0
  %1250 = vmatmul.mubr.bf16.gmra.mrb[0].mxu0 %v1216
  %v1251 = vpop.f32.mrb[0].mxu0
  %v1252 = vadd.f32 0.0, %v1251
  %v1253 = vpop.f32.mrb[0].mxu0
  %v1254 = vadd.f32 0.0, %v1253
  %v1255 = vpop.f32.mrb[0].mxu0
  %v1256 = vpop.f32.mrb[0].mxu0
  %1257 = vdwg.mxu0
  %1258 = vmatprep.subr.bf16.mxu0 %v820
  %1259 = vmatpush1.bf16.msra.mxu0 %v819
  %1260 = vmatprep.subr.bf16.mxu0 %v824
  %1261 = vmatpush1.bf16.msra.mxu0 %v823
  %1262 = vmatprep.subr.bf16.mxu0 %v828
  %1263 = vmatpush1.bf16.msra.mxu0 %v827
  %1264 = vmatprep.subr.bf16.mxu0 %v832
  %1265 = vmatpush1.bf16.msra.mxu0 %v831
  %1266 = vmatprep.subr.bf16.mxu0 %v836
  %1267 = vmatpush1.bf16.msra.mxu0 %v835
  %1268 = vmatprep.subr.bf16.mxu0 %v840
  %1269 = vmatpush1.bf16.msra.mxu0 %v839
  %1270 = vmatprep.subr.bf16.mxu0 %v844
  %1271 = vmatpush1.bf16.msra.mxu0 %v843
  %1272 = vmatprep.subr.bf16.mxu0 %v848
  %1273 = vmatpush1.bf16.msra.mxu0 %v847
  %1274 = vmatprep.subr.bf16.mxu0 0
  %1275 = vmatpush1.bf16.msra.mxu0 0
  %1276 = vmatprep.subr.bf16.mxu0 0
  %1277 = vmatpush1.bf16.msra.mxu0 0
  %1278 = vmatprep.subr.bf16.mxu0 0
  %1279 = vmatpush1.bf16.msra.mxu0 0
  %1280 = vmatprep.subr.bf16.mxu0 0
  %1281 = vmatpush1.bf16.msra.mxu0 0
  %1282 = vmatprep.subr.bf16.mxu0 0
  %1283 = vmatpush1.bf16.msra.mxu0 0
  %1284 = vmatprep.subr.bf16.mxu0 0
  %1285 = vmatpush1.bf16.msra.mxu0 0
  %1286 = vmatprep.subr.bf16.mxu0 0
  %1287 = vmatpush1.bf16.msra.mxu0 0
  %1288 = vmatprep.subr.bf16.mxu0 0
  %1289 = vmatpush1.bf16.msra.mxu0 0
  %1290 = vmatprep.mubr.bf16.mxu0 0
  %1291 = vmatmul.mubr.bf16.gmra.mrb[0].mxu0 %v1216
  %v1292 = vpop.f32.mrb[0].mxu0
  %v1293 = vadd.f32 0.0, %v1292
  %v1294 = vpop.f32.mrb[0].mxu0
  %v1295 = vadd.f32 0.0, %v1294
  %v1296 = vpop.f32.mrb[0].mxu0
  %v1297 = vpop.f32.mrb[0].mxu0
  %1298 = vdwg.mxu0
  %v1299 = vadd.f32 %v1212, %v1252
  %v1300 = vadd.f32 %v1213, %v1254
  %v1301 = vadd.f32 %v1214, %v1293
  %v1302 = vadd.f32 %v1215, %v1295
  %v1303 = vmul.f32 %v1299, 0.5
  %v1304 = vmul.f32 %v1300, 0.5
  %v1305 = vmul.f32 %v1301, 0.5
  %v1306 = vtanh.pop %v1303
  %v1307 = vtanh.pop %v1304
  %v1308 = vtanh.pop %v1305
  %v1309 = vmul.f32 %v1306, 0.5
  %v1310 = vmul.f32 %v1307, 0.5
  %v1311 = vmul.f32 %v1308, 0.5
  %v1312 = vadd.f32 %v1309, 0.5
  %v1313 = vadd.f32 %v1310, 0.5
  %v1314 = vadd.f32 %v1311, 0.5
  %v1315 = vtanh.pop %v1302
  %v1316 = vmul.f32 %v1313, %v1206
  %v1317 = vmul.f32 %v1312, %v1315
  %v1318 = vadd.f32 %v1316, %v1317
  %v1319 = vtanh.pop %v1318
  %v1320 = vmul.f32 %v1314, %v1319
  %s1321 = smul.u32 4, 4
  %s1322 = smul.addr %s1321, 8
  %s1323 = scalar_lea.vmem [#allocation2], %s1322
  %v1324 = vld [vmem:[%s1323] sm:$0xff]
  %v1325 = vld [vmem:[%s1323 + $0x8] sm:$0xff]
  %v1326 = vld [vmem:[%s1323 + $0x10] sm:$0xff]
  %v1327 = vld [vmem:[%s1323 + $0x18] sm:$0xff]
  %v1328 = vpack.c.bf16 %v1320, %v1320
  %1329 = vmatprep.subr.bf16.mxu0 %v818
  %1330 = vmatpush1.bf16.msra.mxu0 %v817
  %1331 = vmatprep.subr.bf16.mxu0 %v822
  %1332 = vmatpush1.bf16.msra.mxu0 %v821
  %1333 = vmatprep.subr.bf16.mxu0 %v826
  %1334 = vmatpush1.bf16.msra.mxu0 %v825
  %1335 = vmatprep.subr.bf16.mxu0 %v830
  %1336 = vmatpush1.bf16.msra.mxu0 %v829
  %1337 = vmatprep.subr.bf16.mxu0 %v834
  %1338 = vmatpush1.bf16.msra.mxu0 %v833
  %1339 = vmatprep.subr.bf16.mxu0 %v838
  %1340 = vmatpush1.bf16.msra.mxu0 %v837
  %1341 = vmatprep.subr.bf16.mxu0 %v842
  %1342 = vmatpush1.bf16.msra.mxu0 %v841
  %1343 = vmatprep.subr.bf16.mxu0 %v846
  %1344 = vmatpush1.bf16.msra.mxu0 %v845
  %1345 = vmatprep.subr.bf16.mxu0 0
  %1346 = vmatpush1.bf16.msra.mxu0 0
  %1347 = vmatprep.subr.bf16.mxu0 0
  %1348 = vmatpush1.bf16.msra.mxu0 0
  %1349 = vmatprep.subr.bf16.mxu0 0
  %1350 = vmatpush1.bf16.msra.mxu0 0
  %1351 = vmatprep.subr.bf16.mxu0 0
  %1352 = vmatpush1.bf16.msra.mxu0 0
  %1353 = vmatprep.subr.bf16.mxu0 0
  %1354 = vmatpush1.bf16.msra.mxu0 0
  %1355 = vmatprep.subr.bf16.mxu0 0
  %1356 = vmatpush1.bf16.msra.mxu0 0
  %1357 = vmatprep.subr.bf16.mxu0 0
  %1358 = vmatpush1.bf16.msra.mxu0 0
  %1359 = vmatprep.subr.bf16.mxu0 0
  %1360 = vmatpush1.bf16.msra.mxu0 0
  %1361 = vmatprep.mubr.bf16.mxu0 0
  %1362 = vmatmul.mubr.bf16.gmra.mrb[0].mxu0 %v1328
  %v1363 = vpop.f32.mrb[0].mxu0
  %v1364 = vadd.f32 0.0, %v1363
  %v1365 = vpop.f32.mrb[0].mxu0
  %v1366 = vadd.f32 0.0, %v1365
  %v1367 = vpop.f32.mrb[0].mxu0
  %v1368 = vpop.f32.mrb[0].mxu0
  %1369 = vdwg.mxu0
  %1370 = vmatprep.subr.bf16.mxu0 %v820
  %1371 = vmatpush1.bf16.msra.mxu0 %v819
  %1372 = vmatprep.subr.bf16.mxu0 %v824
  %1373 = vmatpush1.bf16.msra.mxu0 %v823
  %1374 = vmatprep.subr.bf16.mxu0 %v828
  %1375 = vmatpush1.bf16.msra.mxu0 %v827
  %1376 = vmatprep.subr.bf16.mxu0 %v832
  %1377 = vmatpush1.bf16.msra.mxu0 %v831
  %1378 = vmatprep.subr.bf16.mxu0 %v836
  %1379 = vmatpush1.bf16.msra.mxu0 %v835
  %1380 = vmatprep.subr.bf16.mxu0 %v840
  %1381 = vmatpush1.bf16.msra.mxu0 %v839
  %1382 = vmatprep.subr.bf16.mxu0 %v844
  %1383 = vmatpush1.bf16.msra.mxu0 %v843
  %1384 = vmatprep.subr.bf16.mxu0 %v848
  %1385 = vmatpush1.bf16.msra.mxu0 %v847
  %1386 = vmatprep.subr.bf16.mxu0 0
  %1387 = vmatpush1.bf16.msra.mxu0 0
  %1388 = vmatprep.subr.bf16.mxu0 0
  %1389 = vmatpush1.bf16.msra.mxu0 0
  %1390 = vmatprep.subr.bf16.mxu0 0
  %1391 = vmatpush1.bf16.msra.mxu0 0
  %1392 = vmatprep.subr.bf16.mxu0 0
  %1393 = vmatpush1.bf16.msra.mxu0 0
  %1394 = vmatprep.subr.bf16.mxu0 0
  %1395 = vmatpush1.bf16.msra.mxu0 0
  %1396 = vmatprep.subr.bf16.mxu0 0
  %1397 = vmatpush1.bf16.msra.mxu0 0
  %1398 = vmatprep.subr.bf16.mxu0 0
  %1399 = vmatpush1.bf16.msra.mxu0 0
  %1400 = vmatprep.subr.bf16.mxu0 0
  %1401 = vmatpush1.bf16.msra.mxu0 0
  %1402 = vmatprep.mubr.bf16.mxu0 0
  %1403 = vmatmul.mubr.bf16.gmra.mrb[0].mxu0 %v1328
  %v1404 = vpop.f32.mrb[0].mxu0
  %v1405 = vadd.f32 0.0, %v1404
  %v1406 = vpop.f32.mrb[0].mxu0
  %v1407 = vadd.f32 0.0, %v1406
  %v1408 = vpop.f32.mrb[0].mxu0
  %v1409 = vpop.f32.mrb[0].mxu0
  %1410 = vdwg.mxu0
  %v1411 = vadd.f32 %v1324, %v1364
  %v1412 = vadd.f32 %v1325, %v1366
  %v1413 = vadd.f32 %v1326, %v1405
  %v1414 = vadd.f32 %v1327, %v1407
  %v1415 = vmul.f32 %v1411, 0.5
  %v1416 = vmul.f32 %v1412, 0.5
  %v1417 = vmul.f32 %v1413, 0.5
  %v1418 = vtanh.pop %v1415
  %v1419 = vtanh.pop %v1416
  %v1420 = vtanh.pop %v1417
  %v1421 = vmul.f32 %v1418, 0.5
  %v1422 = vmul.f32 %v1419, 0.5
  %v1423 = vmul.f32 %v1420, 0.5
  %v1424 = vadd.f32 %v1421, 0.5
  %v1425 = vadd.f32 %v1422, 0.5
  %v1426 = vadd.f32 %v1423, 0.5
  %v1427 = vtanh.pop %v1414
  %v1428 = vmul.f32 %v1425, %v1318
  %v1429 = vmul.f32 %v1424, %v1427
  %v1430 = vadd.f32 %v1428, %v1429
  %v1431 = vtanh.pop %v1430
  %v1432 = vmul.f32 %v1426, %v1431
  %s1433 = smul.u32 5, 4
  %s1434 = smul.addr %s1433, 8
  %s1435 = scalar_lea.vmem [#allocation2], %s1434
  %v1436 = vld [vmem:[%s1435] sm:$0xff]
  %v1437 = vld [vmem:[%s1435 + $0x8] sm:$0xff]
  %v1438 = vld [vmem:[%s1435 + $0x10] sm:$0xff]
  %v1439 = vld [vmem:[%s1435 + $0x18] sm:$0xff]
  %v1440 = vpack.c.bf16 %v1432, %v1432
  %1441 = vmatprep.subr.bf16.mxu0 %v818
  %1442 = vmatpush1.bf16.msra.mxu0 %v817
  %1443 = vmatprep.subr.bf16.mxu0 %v822
  %1444 = vmatpush1.bf16.msra.mxu0 %v821
  %1445 = vmatprep.subr.bf16.mxu0 %v826
  %1446 = vmatpush1.bf16.msra.mxu0 %v825
  %1447 = vmatprep.subr.bf16.mxu0 %v830
  %1448 = vmatpush1.bf16.msra.mxu0 %v829
  %1449 = vmatprep.subr.bf16.mxu0 %v834
  %1450 = vmatpush1.bf16.msra.mxu0 %v833
  %1451 = vmatprep.subr.bf16.mxu0 %v838
  %1452 = vmatpush1.bf16.msra.mxu0 %v837
  %1453 = vmatprep.subr.bf16.mxu0 %v842
  %1454 = vmatpush1.bf16.msra.mxu0 %v841
  %1455 = vmatprep.subr.bf16.mxu0 %v846
  %1456 = vmatpush1.bf16.msra.mxu0 %v845
  %1457 = vmatprep.subr.bf16.mxu0 0
  %1458 = vmatpush1.bf16.msra.mxu0 0
  %1459 = vmatprep.subr.bf16.mxu0 0
  %1460 = vmatpush1.bf16.msra.mxu0 0
  %1461 = vmatprep.subr.bf16.mxu0 0
  %1462 = vmatpush1.bf16.msra.mxu0 0
  %1463 = vmatprep.subr.bf16.mxu0 0
  %1464 = vmatpush1.bf16.msra.mxu0 0
  %1465 = vmatprep.subr.bf16.mxu0 0
  %1466 = vmatpush1.bf16.msra.mxu0 0
  %1467 = vmatprep.subr.bf16.mxu0 0
  %1468 = vmatpush1.bf16.msra.mxu0 0
  %1469 = vmatprep.subr.bf16.mxu0 0
  %1470 = vmatpush1.bf16.msra.mxu0 0
  %1471 = vmatprep.subr.bf16.mxu0 0
  %1472 = vmatpush1.bf16.msra.mxu0 0
  %1473 = vmatprep.mubr.bf16.mxu0 0
  %1474 = vmatmul.mubr.bf16.gmra.mrb[0].mxu0 %v1440
  %v1475 = vpop.f32.mrb[0].mxu0
  %v1476 = vadd.f32 0.0, %v1475
  %v1477 = vpop.f32.mrb[0].mxu0
  %v1478 = vadd.f32 0.0, %v1477
  %v1479 = vpop.f32.mrb[0].mxu0
  %v1480 = vpop.f32.mrb[0].mxu0
  %1481 = vdwg.mxu0
  %1482 = vmatprep.subr.bf16.mxu0 %v820
  %1483 = vmatpush1.bf16.msra.mxu0 %v819
  %1484 = vmatprep.subr.bf16.mxu0 %v824
  %1485 = vmatpush1.bf16.msra.mxu0 %v823
  %1486 = vmatprep.subr.bf16.mxu0 %v828
  %1487 = vmatpush1.bf16.msra.mxu0 %v827
  %1488 = vmatprep.subr.bf16.mxu0 %v832
  %1489 = vmatpush1.bf16.msra.mxu0 %v831
  %1490 = vmatprep.subr.bf16.mxu0 %v836
  %1491 = vmatpush1.bf16.msra.mxu0 %v835
  %1492 = vmatprep.subr.bf16.mxu0 %v840
  %1493 = vmatpush1.bf16.msra.mxu0 %v839
  %1494 = vmatprep.subr.bf16.mxu0 %v844
  %1495 = vmatpush1.bf16.msra.mxu0 %v843
  %1496 = vmatprep.subr.bf16.mxu0 %v848
  %1497 = vmatpush1.bf16.msra.mxu0 %v847
  %1498 = vmatprep.subr.bf16.mxu0 0
  %1499 = vmatpush1.bf16.msra.mxu0 0
  %1500 = vmatprep.subr.bf16.mxu0 0
  %1501 = vmatpush1.bf16.msra.mxu0 0
  %1502 = vmatprep.subr.bf16.mxu0 0
  %1503 = vmatpush1.bf16.msra.mxu0 0
  %1504 = vmatprep.subr.bf16.mxu0 0
  %1505 = vmatpush1.bf16.msra.mxu0 0
  %1506 = vmatprep.subr.bf16.mxu0 0
  %1507 = vmatpush1.bf16.msra.mxu0 0
  %1508 = vmatprep.subr.bf16.mxu0 0
  %1509 = vmatpush1.bf16.msra.mxu0 0
  %1510 = vmatprep.subr.bf16.mxu0 0
  %1511 = vmatpush1.bf16.msra.mxu0 0
  %1512 = vmatprep.subr.bf16.mxu0 0
  %1513 = vmatpush1.bf16.msra.mxu0 0
  %1514 = vmatprep.mubr.bf16.mxu0 0
  %1515 = vmatmul.mubr.bf16.gmra.mrb[0].mxu0 %v1440
  %v1516 = vpop.f32.mrb[0].mxu0
  %v1517 = vadd.f32 0.0, %v1516
  %v1518 = vpop.f32.mrb[0].mxu0
  %v1519 = vadd.f32 0.0, %v1518
  %v1520 = vpop.f32.mrb[0].mxu0
  %v1521 = vpop.f32.mrb[0].mxu0
  %1522 = vdwg.mxu0
  %v1523 = vadd.f32 %v1436, %v1476
  %v1524 = vadd.f32 %v1437, %v1478
  %v1525 = vadd.f32 %v1438, %v1517
  %v1526 = vadd.f32 %v1439, %v1519
  %v1527 = vmul.f32 %v1523, 0.5
  %v1528 = vmul.f32 %v1524, 0.5
  %v1529 = vmul.f32 %v1525, 0.5
  %v1530 = vtanh.pop %v1527
  %v1531 = vtanh.pop %v1528
  %v1532 = vtanh.pop %v1529
  %v1533 = vmul.f32 %v1530, 0.5
  %v1534 = vmul.f32 %v1531, 0.5
  %v1535 = vmul.f32 %v1532, 0.5
  %v1536 = vadd.f32 %v1533, 0.5
  %v1537 = vadd.f32 %v1534, 0.5
  %v1538 = vadd.f32 %v1535, 0.5
  %v1539 = vtanh.pop %v1526
  %v1540 = vmul.f32 %v1537, %v1430
  %v1541 = vmul.f32 %v1536, %v1539
  %v1542 = vadd.f32 %v1540, %v1541
  %v1543 = vtanh.pop %v1542
  %v1544 = vmul.f32 %v1538, %v1543
  %s1545 = smul.u32 6, 4
  %s1546 = smul.addr %s1545, 8
  %s1547 = scalar_lea.vmem [#allocation2], %s1546
  %v1548 = vld [vmem:[%s1547] sm:$0xff]
  %v1549 = vld [vmem:[%s1547 + $0x8] sm:$0xff]
  %v1550 = vld [vmem:[%s1547 + $0x10] sm:$0xff]
  %v1551 = vld [vmem:[%s1547 + $0x18] sm:$0xff]
  %v1552 = vpack.c.bf16 %v1544, %v1544
  %1553 = vmatprep.subr.bf16.mxu0 %v818
  %1554 = vmatpush1.bf16.msra.mxu0 %v817
  %1555 = vmatprep.subr.bf16.mxu0 %v822
  %1556 = vmatpush1.bf16.msra.mxu0 %v821
  %1557 = vmatprep.subr.bf16.mxu0 %v826
  %1558 = vmatpush1.bf16.msra.mxu0 %v825
  %1559 = vmatprep.subr.bf16.mxu0 %v830
  %1560 = vmatpush1.bf16.msra.mxu0 %v829
  %1561 = vmatprep.subr.bf16.mxu0 %v834
  %1562 = vmatpush1.bf16.msra.mxu0 %v833
  %1563 = vmatprep.subr.bf16.mxu0 %v838
  %1564 = vmatpush1.bf16.msra.mxu0 %v837
  %1565 = vmatprep.subr.bf16.mxu0 %v842
  %1566 = vmatpush1.bf16.msra.mxu0 %v841
  %1567 = vmatprep.subr.bf16.mxu0 %v846
  %1568 = vmatpush1.bf16.msra.mxu0 %v845
  %1569 = vmatprep.subr.bf16.mxu0 0
  %1570 = vmatpush1.bf16.msra.mxu0 0
  %1571 = vmatprep.subr.bf16.mxu0 0
  %1572 = vmatpush1.bf16.msra.mxu0 0
  %1573 = vmatprep.subr.bf16.mxu0 0
  %1574 = vmatpush1.bf16.msra.mxu0 0
  %1575 = vmatprep.subr.bf16.mxu0 0
  %1576 = vmatpush1.bf16.msra.mxu0 0
  %1577 = vmatprep.subr.bf16.mxu0 0
  %1578 = vmatpush1.bf16.msra.mxu0 0
  %1579 = vmatprep.subr.bf16.mxu0 0
  %1580 = vmatpush1.bf16.msra.mxu0 0
  %1581 = vmatprep.subr.bf16.mxu0 0
  %1582 = vmatpush1.bf16.msra.mxu0 0
  %1583 = vmatprep.subr.bf16.mxu0 0
  %1584 = vmatpush1.bf16.msra.mxu0 0
  %1585 = vmatprep.mubr.bf16.mxu0 0
  %1586 = vmatmul.mubr.bf16.gmra.mrb[0].mxu0 %v1552
  %v1587 = vpop.f32.mrb[0].mxu0
  %v1588 = vadd.f32 0.0, %v1587
  %v1589 = vpop.f32.mrb[0].mxu0
  %v1590 = vadd.f32 0.0, %v1589
  %v1591 = vpop.f32.mrb[0].mxu0
  %v1592 = vpop.f32.mrb[0].mxu0
  %1593 = vdwg.mxu0
  %1594 = vmatprep.subr.bf16.mxu0 %v820
  %1595 = vmatpush1.bf16.msra.mxu0 %v819
  %1596 = vmatprep.subr.bf16.mxu0 %v824
  %1597 = vmatpush1.bf16.msra.mxu0 %v823
  %1598 = vmatprep.subr.bf16.mxu0 %v828
  %1599 = vmatpush1.bf16.msra.mxu0 %v827
  %1600 = vmatprep.subr.bf16.mxu0 %v832
  %1601 = vmatpush1.bf16.msra.mxu0 %v831
  %1602 = vmatprep.subr.bf16.mxu0 %v836
  %1603 = vmatpush1.bf16.msra.mxu0 %v835
  %1604 = vmatprep.subr.bf16.mxu0 %v840
  %1605 = vmatpush1.bf16.msra.mxu0 %v839
  %1606 = vmatprep.subr.bf16.mxu0 %v844
  %1607 = vmatpush1.bf16.msra.mxu0 %v843
  %1608 = vmatprep.subr.bf16.mxu0 %v848
  %1609 = vmatpush1.bf16.msra.mxu0 %v847
  %1610 = vmatprep.subr.bf16.mxu0 0
  %1611 = vmatpush1.bf16.msra.mxu0 0
  %1612 = vmatprep.subr.bf16.mxu0 0
  %1613 = vmatpush1.bf16.msra.mxu0 0
  %1614 = vmatprep.subr.bf16.mxu0 0
  %1615 = vmatpush1.bf16.msra.mxu0 0
  %1616 = vmatprep.subr.bf16.mxu0 0
  %1617 = vmatpush1.bf16.msra.mxu0 0
  %1618 = vmatprep.subr.bf16.mxu0 0
  %1619 = vmatpush1.bf16.msra.mxu0 0
  %1620 = vmatprep.subr.bf16.mxu0 0
  %1621 = vmatpush1.bf16.msra.mxu0 0
  %1622 = vmatprep.subr.bf16.mxu0 0
  %1623 = vmatpush1.bf16.msra.mxu0 0
  %1624 = vmatprep.subr.bf16.mxu0 0
  %1625 = vmatpush1.bf16.msra.mxu0 0
  %1626 = vmatprep.mubr.bf16.mxu0 0
  %1627 = vmatmul.mubr.bf16.gmra.mrb[0].mxu0 %v1552
  %v1628 = vpop.f32.mrb[0].mxu0
  %v1629 = vadd.f32 0.0, %v1628
  %v1630 = vpop.f32.mrb[0].mxu0
  %v1631 = vadd.f32 0.0, %v1630
  %v1632 = vpop.f32.mrb[0].mxu0
  %v1633 = vpop.f32.mrb[0].mxu0
  %1634 = vdwg.mxu0
  %v1635 = vadd.f32 %v1548, %v1588
  %v1636 = vadd.f32 %v1549, %v1590
  %v1637 = vadd.f32 %v1550, %v1629
  %v1638 = vadd.f32 %v1551, %v1631
  %v1639 = vmul.f32 %v1635, 0.5
  %v1640 = vmul.f32 %v1636, 0.5
  %v1641 = vmul.f32 %v1637, 0.5
  %v1642 = vtanh.pop %v1639
  %v1643 = vtanh.pop %v1640
  %v1644 = vtanh.pop %v1641
  %v1645 = vmul.f32 %v1642, 0.5
  %v1646 = vmul.f32 %v1643, 0.5
  %v1647 = vmul.f32 %v1644, 0.5
  %v1648 = vadd.f32 %v1645, 0.5
  %v1649 = vadd.f32 %v1646, 0.5
  %v1650 = vadd.f32 %v1647, 0.5
  %v1651 = vtanh.pop %v1638
  %v1652 = vmul.f32 %v1649, %v1542
  %v1653 = vmul.f32 %v1648, %v1651
  %v1654 = vadd.f32 %v1652, %v1653
  %v1655 = vtanh.pop %v1654
  %v1656 = vmul.f32 %v1650, %v1655
  %s1657 = smul.u32 7, 4
  %s1658 = smul.addr %s1657, 8
  %s1659 = scalar_lea.vmem [#allocation2], %s1658
  %v1660 = vld [vmem:[%s1659] sm:$0xff]
  %v1661 = vld [vmem:[%s1659 + $0x8] sm:$0xff]
  %v1662 = vld [vmem:[%s1659 + $0x10] sm:$0xff]
  %v1663 = vld [vmem:[%s1659 + $0x18] sm:$0xff]
  %v1664 = vpack.c.bf16 %v1656, %v1656
  %1665 = vmatprep.subr.bf16.mxu0 %v818
  %1666 = vmatpush1.bf16.msra.mxu0 %v817
  %1667 = vmatprep.subr.bf16.mxu0 %v822
  %1668 = vmatpush1.bf16.msra.mxu0 %v821
  %1669 = vmatprep.subr.bf16.mxu0 %v826
  %1670 = vmatpush1.bf16.msra.mxu0 %v825
  %1671 = vmatprep.subr.bf16.mxu0 %v830
  %1672 = vmatpush1.bf16.msra.mxu0 %v829
  %1673 = vmatprep.subr.bf16.mxu0 %v834
  %1674 = vmatpush1.bf16.msra.mxu0 %v833
  %1675 = vmatprep.subr.bf16.mxu0 %v838
  %1676 = vmatpush1.bf16.msra.mxu0 %v837
  %1677 = vmatprep.subr.bf16.mxu0 %v842
  %1678 = vmatpush1.bf16.msra.mxu0 %v841
  %1679 = vmatprep.subr.bf16.mxu0 %v846
  %1680 = vmatpush1.bf16.msra.mxu0 %v845
  %1681 = vmatprep.subr.bf16.mxu0 0
  %1682 = vmatpush1.bf16.msra.mxu0 0
  %1683 = vmatprep.subr.bf16.mxu0 0
  %1684 = vmatpush1.bf16.msra.mxu0 0
  %1685 = vmatprep.subr.bf16.mxu0 0
  %1686 = vmatpush1.bf16.msra.mxu0 0
  %1687 = vmatprep.subr.bf16.mxu0 0
  %1688 = vmatpush1.bf16.msra.mxu0 0
  %1689 = vmatprep.subr.bf16.mxu0 0
  %1690 = vmatpush1.bf16.msra.mxu0 0
  %1691 = vmatprep.subr.bf16.mxu0 0
  %1692 = vmatpush1.bf16.msra.mxu0 0
  %1693 = vmatprep.subr.bf16.mxu0 0
  %1694 = vmatpush1.bf16.msra.mxu0 0
  %1695 = vmatprep.subr.bf16.mxu0 0
  %1696 = vmatpush1.bf16.msra.mxu0 0
  %1697 = vmatprep.mubr.bf16.mxu0 0
  %1698 = vmatmul.mubr.bf16.gmra.mrb[0].mxu0 %v1664
  %v1699 = vpop.f32.mrb[0].mxu0
  %v1700 = vadd.f32 0.0, %v1699
  %v1701 = vpop.f32.mrb[0].mxu0
  %v1702 = vadd.f32 0.0, %v1701
  %v1703 = vpop.f32.mrb[0].mxu0
  %v1704 = vpop.f32.mrb[0].mxu0
  %1705 = vdwg.mxu0
  %1706 = vmatprep.subr.bf16.mxu0 %v820
  %1707 = vmatpush1.bf16.msra.mxu0 %v819
  %1708 = vmatprep.subr.bf16.mxu0 %v824
  %1709 = vmatpush1.bf16.msra.mxu0 %v823
  %1710 = vmatprep.subr.bf16.mxu0 %v828
  %1711 = vmatpush1.bf16.msra.mxu0 %v827
  %1712 = vmatprep.subr.bf16.mxu0 %v832
  %1713 = vmatpush1.bf16.msra.mxu0 %v831
  %1714 = vmatprep.subr.bf16.mxu0 %v836
  %1715 = vmatpush1.bf16.msra.mxu0 %v835
  %1716 = vmatprep.subr.bf16.mxu0 %v840
  %1717 = vmatpush1.bf16.msra.mxu0 %v839
  %1718 = vmatprep.subr.bf16.mxu0 %v844
  %1719 = vmatpush1.bf16.msra.mxu0 %v843
  %1720 = vmatprep.subr.bf16.mxu0 %v848
  %1721 = vmatpush1.bf16.msra.mxu0 %v847
  %1722 = vmatprep.subr.bf16.mxu0 0
  %1723 = vmatpush1.bf16.msra.mxu0 0
  %1724 = vmatprep.subr.bf16.mxu0 0
  %1725 = vmatpush1.bf16.msra.mxu0 0
  %1726 = vmatprep.subr.bf16.mxu0 0
  %1727 = vmatpush1.bf16.msra.mxu0 0
  %1728 = vmatprep.subr.bf16.mxu0 0
  %1729 = vmatpush1.bf16.msra.mxu0 0
  %1730 = vmatprep.subr.bf16.mxu0 0
  %1731 = vmatpush1.bf16.msra.mxu0 0
  %1732 = vmatprep.subr.bf16.mxu0 0
  %1733 = vmatpush1.bf16.msra.mxu0 0
  %1734 = vmatprep.subr.bf16.mxu0 0
  %1735 = vmatpush1.bf16.msra.mxu0 0
  %1736 = vmatprep.subr.bf16.mxu0 0
  %1737 = vmatpush1.bf16.msra.mxu0 0
  %1738 = vmatprep.mubr.bf16.mxu0 0
  %1739 = vmatmul.mubr.bf16.gmra.mrb[0].mxu0 %v1664
  %v1740 = vpop.f32.mrb[0].mxu0
  %v1741 = vadd.f32 0.0, %v1740
  %v1742 = vpop.f32.mrb[0].mxu0
  %v1743 = vadd.f32 0.0, %v1742
  %v1744 = vpop.f32.mrb[0].mxu0
  %v1745 = vpop.f32.mrb[0].mxu0
  %1746 = vdwg.mxu0
  %v1747 = vadd.f32 %v1660, %v1700
  %v1748 = vadd.f32 %v1661, %v1702
  %v1749 = vadd.f32 %v1662, %v1741
  %v1750 = vadd.f32 %v1663, %v1743
  %v1751 = vmul.f32 %v1747, 0.5
  %v1752 = vmul.f32 %v1748, 0.5
  %v1753 = vmul.f32 %v1749, 0.5
  %v1754 = vtanh.pop %v1751
  %v1755 = vtanh.pop %v1752
  %v1756 = vtanh.pop %v1753
  %v1757 = vmul.f32 %v1754, 0.5
  %v1758 = vmul.f32 %v1755, 0.5
  %v1759 = vmul.f32 %v1756, 0.5
  %v1760 = vadd.f32 %v1757, 0.5
  %v1761 = vadd.f32 %v1758, 0.5
  %v1762 = vadd.f32 %v1759, 0.5
  %v1763 = vtanh.pop %v1750
  %v1764 = vmul.f32 %v1761, %v1654
  %v1765 = vmul.f32 %v1760, %v1763
  %v1766 = vadd.f32 %v1764, %v1765
  %v1767 = vtanh.pop %v1766
  %v1768 = vmul.f32 %v1762, %v1767
  %1769 = vst [vmem:[#allocation3] sm:$0xff] %v1768
  %1770 = vst [vmem:[#allocation4] sm:$0xff] %v1766
  // Predicated region
  $region38: #{fall_lstm_forward.1} parent=0 // pred_check
    %p1771 = pneg %p644
  $region39: #{fall_lstm_forward.1} parent=0 // pred_check_branch
    %1773 = sbr.rel (%p1771) target = $region41
  $region40: #{fall_lstm_forward.1} parent=0 // pred_region
    %v1774 = vld [vmem:[#allocation3] sm:$0xff]
    %v1775 = vld [vmem:[#allocation4] sm:$0xff]
    %v1776 = vpack.c.bf16 %v1774, %v1774
    %v1777 = vld [vmem:[%s4] sm:$0xff]
    %v1778 = vld [vmem:[%s4 + $0x8] sm:$0xff]
    %v1779 = vld [vmem:[%s4 + $0x10] sm:$0xff]
    %v1780 = vld [vmem:[%s4 + $0x18] sm:$0xff]
    %v1781 = vld [vmem:[%s4 + $0x20] sm:$0xff]
    %v1782 = vld [vmem:[%s4 + $0x28] sm:$0xff]
    %v1783 = vld [vmem:[%s4 + $0x30] sm:$0xff]
    %v1784 = vld [vmem:[%s4 + $0x38] sm:$0xff]
    %v1785 = vld [vmem:[%s4 + $0x40] sm:$0xff]
    %v1786 = vld [vmem:[%s4 + $0x48] sm:$0xff]
    %v1787 = vld [vmem:[%s4 + $0x50] sm:$0xff]
    %v1788 = vld [vmem:[%s4 + $0x58] sm:$0xff]
    %v1789 = vld [vmem:[%s4 + $0x60] sm:$0xff]
    %v1790 = vld [vmem:[%s4 + $0x68] sm:$0xff]
    %v1791 = vld [vmem:[%s4 + $0x70] sm:$0xff]
    %v1792 = vld [vmem:[%s4 + $0x78] sm:$0xff]
    %v1793 = vld [vmem:[%s5] sm:$0x3]
    %v1795 = vlaneseq
    %v1796 = vshrl.u32 %v1795, 7
    %v1797 = vsub.s32 0, %v1796
    %v1798 = vrot.slane %v1793, %v1797
    %v1799 = vlaneseq
    %v1800 = vshrl.u32 %v1799, 7
    %v1801 = vsub.s32 1, %v1800
    %v1802 = vrot.slane %v1793, %v1801
    %v1821 = vunpack.c.l.b16 %v1777
    %v1822 = vunpack.c.h.b16 %v1777
    %v1823 = vunpack.c.l.b16 %v1778
    %v1824 = vunpack.c.h.b16 %v1778
    %v1825 = vunpack.c.l.b16 %v1779
    %v1826 = vunpack.c.h.b16 %v1779
    %v1827 = vunpack.c.l.b16 %v1780
    %v1828 = vunpack.c.h.b16 %v1780
    %v1829 = vunpack.c.l.b16 %v1781
    %v1830 = vunpack.c.h.b16 %v1781
    %v1831 = vunpack.c.l.b16 %v1782
    %v1832 = vunpack.c.h.b16 %v1782
    %v1833 = vunpack.c.l.b16 %v1783
    %v1834 = vunpack.c.h.b16 %v1783
    %v1835 = vunpack.c.l.b16 %v1784
    %v1836 = vunpack.c.h.b16 %v1784
    %v1837 = vunpack.c.l.b16 %v1785
    %v1838 = vunpack.c.h.b16 %v1785
    %v1839 = vunpack.c.l.b16 %v1786
    %v1840 = vunpack.c.h.b16 %v1786
    %v1841 = vunpack.c.l.b16 %v1787
    %v1842 = vunpack.c.h.b16 %v1787
    %v1843 = vunpack.c.l.b16 %v1788
    %v1844 = vunpack.c.h.b16 %v1788
    %v1845 = vunpack.c.l.b16 %v1789
    %v1846 = vunpack.c.h.b16 %v1789
    %v1847 = vunpack.c.l.b16 %v1790
    %v1848 = vunpack.c.h.b16 %v1790
    %v1849 = vunpack.c.l.b16 %v1791
    %v1850 = vunpack.c.h.b16 %v1791
    %v1851 = vunpack.c.l.b16 %v1792
    %v1852 = vunpack.c.h.b16 %v1792
    %v1853 = vpack.c.b16 %v1823, %v1821
    %v1854 = vpack.c.b16 %v1824, %v1822
    %v1855 = vpack.c.b16 %v1827, %v1825
    %v1856 = vpack.c.b16 %v1828, %v1826
    %v1857 = vpack.c.b16 %v1831, %v1829
    %v1858 = vpack.c.b16 %v1832, %v1830
    %v1859 = vpack.c.b16 %v1835, %v1833
    %v1860 = vpack.c.b16 %v1836, %v1834
    %v1861 = vpack.c.b16 %v1839, %v1837
    %v1862 = vpack.c.b16 %v1840, %v1838
    %v1863 = vpack.c.b16 %v1843, %v1841
    %v1864 = vpack.c.b16 %v1844, %v1842
    %v1865 = vpack.c.b16 %v1847, %v1845
    %v1866 = vpack.c.b16 %v1848, %v1846
    %v1867 = vpack.c.b16 %v1851, %v1849
    %v1868 = vpack.c.b16 %v1852, %v1850
    %1885 = vmatprep.subr.bf16.mxu0 %v1854
    %1886 = vmatpush1.bf16.msra.mxu0 %v1853
    %1887 = vmatprep.subr.bf16.mxu0 %v1856
    %1888 = vmatpush1.bf16.msra.mxu0 %v1855
    %1889 = vmatprep.subr.bf16.mxu0 %v1858
    %1890 = vmatpush1.bf16.msra.mxu0 %v1857
    %1891 = vmatprep.subr.bf16.mxu0 %v1860
    %1892 = vmatpush1.bf16.msra.mxu0 %v1859
    %1893 = vmatprep.subr.bf16.mxu0 %v1862
    %1894 = vmatpush1.bf16.msra.mxu0 %v1861
    %1895 = vmatprep.subr.bf16.mxu0 %v1864
    %1896 = vmatpush1.bf16.msra.mxu0 %v1863
    %1897 = vmatprep.subr.bf16.mxu0 %v1866
    %1898 = vmatpush1.bf16.msra.mxu0 %v1865
    %1899 = vmatprep.subr.bf16.mxu0 %v1868
    %1900 = vmatpush1.bf16.msra.mxu0 %v1867
    %1901 = vmatprep.subr.bf16.mxu0 0
    %1902 = vmatpush1.bf16.msra.mxu0 0
    %1903 = vmatprep.subr.bf16.mxu0 0
    %1904 = vmatpush1.bf16.msra.mxu0 0
    %1905 = vmatprep.subr.bf16.mxu0 0
    %1906 = vmatpush1.bf16.msra.mxu0 0
    %1907 = vmatprep.subr.bf16.mxu0 0
    %1908 = vmatpush1.bf16.msra.mxu0 0
    %1909 = vmatprep.subr.bf16.mxu0 0
    %1910 = vmatpush1.bf16.msra.mxu0 0
    %1911 = vmatprep.subr.bf16.mxu0 0
    %1912 = vmatpush1.bf16.msra.mxu0 0
    %1913 = vmatprep.subr.bf16.mxu0 0
    %1914 = vmatpush1.bf16.msra.mxu0 0
    %1915 = vmatprep.subr.bf16.mxu0 0
    %1916 = vmatpush1.bf16.msra.mxu0 0
    %1917 = vmatprep.mubr.bf16.mxu0 0
    %1918 = vmatmul.mubr.bf16.gmra.mrb[0].mxu0 %v1776
    %v1919 = vpop.f32.mrb[0].mxu0
    %v1920 = vadd.f32 %v1798, %v1919
    %v1921 = vpop.f32.mrb[0].mxu0
    %v1922 = vadd.f32 %v1802, %v1921
    %v1923 = vpop.f32.mrb[0].mxu0
    %v1924 = vpop.f32.mrb[0].mxu0
    %1925 = vdwg.mxu0
    %v1926 = vmul.f32 %v1920, 0.5
    %v1927 = vmul.f32 %v1922, 0.5
    %v1928 = vtanh.pop %v1926
    %v1929 = vtanh.pop %v1927
    %v1930 = vmul.f32 %v1928, 0.5
    %v1931 = vmul.f32 %v1929, 0.5
    %v1932 = vadd.f32 %v1930, 0.5
    %v1933 = vadd.f32 %v1931, 0.5
    %v1934 = vtanh.pop %v1922
    %v1935 = vmul.f32 %v1932, %v1775
    %1937 = vrot.lane.b32.xlu0 %v1934, 64
    %v1938 = vpop.permute.xlu0 %1937
    %v1940 = vmul.f32 %v1932, %v1938
    %1942 = vrot.lane.b32.xlu0 %v1940, 64
    %v1943 = vpop.permute.xlu0 %1942
    %v1945 = vadd.f32 %v1935, %v1943
    %v1946 = vtanh.pop %v1945
    %1948 = vrot.lane.b32.xlu0 %v1946, 64
    %v1949 = vpop.permute.xlu0 %1948
    %v1951 = vmul.f32 %v1933, %v1949
    %v1952 = vld [vmem:[%s6] sm:$0xff]
    %v1953 = vld [vmem:[%s6 + $0x8] sm:$0xff]
    %v1954 = vld [vmem:[%s6 + $0x10] sm:$0xff]
    %v1955 = vld [vmem:[%s6 + $0x18] sm:$0xff]
    %v1956 = vld [vmem:[%s6 + $0x20] sm:$0xff]
    %v1957 = vld [vmem:[%s6 + $0x28] sm:$0xff]
    %v1958 = vld [vmem:[%s6 + $0x30] sm:$0xff]
    %v1959 = vld [vmem:[%s6 + $0x38] sm:$0xff]
    %v1960 = vld [vmem:[%s7] sm:$0x1]
    %v1962 = vlaneseq
    %v1963 = vshrl.u32 %v1962, 7
    %v1964 = vsub.s32 0, %v1963
    %v1965 = vrot.slane %v1960, %v1964
    %vm1967 = vcmask 523264
    %v1969 = vsel %vm1967, %v1951, 0
    %1971 = vmatprep.subr.mxu0 0.0
    %1972 = vmatpush1.msra.mxu0 %v1952
    %1973 = vmatprep.subr.mxu0 0.0
    %1974 = vmatpush1.msra.mxu0 %v1953
    %1975 = vmatprep.subr.mxu0 0.0
    %1976 = vmatpush1.msra.mxu0 %v1954
    %1977 = vmatprep.subr.mxu0 0.0
    %1978 = vmatpush1.msra.mxu0 %v1955
    %1979 = vmatprep.subr.mxu0 0.0
    %1980 = vmatpush1.msra.mxu0 %v1956
    %1981 = vmatprep.subr.mxu0 0.0
    %1982 = vmatpush1.msra.mxu0 %v1957
    %1983 = vmatprep.subr.mxu0 0.0
    %1984 = vmatpush1.msra.mxu0 %v1958
    %1985 = vmatprep.subr.mxu0 0.0
    %1986 = vmatpush1.msra.mxu0 %v1959
    %1987 = vmatprep.subr.mxu0 0.0
    %1988 = vmatpush1.msra.mxu0 0.0
    %1989 = vmatprep.subr.mxu0 0.0
    %1990 = vmatpush1.msra.mxu0 0.0
    %1991 = vmatprep.subr.mxu0 0.0
    %1992 = vmatpush1.msra.mxu0 0.0
    %1993 = vmatprep.subr.mxu0 0.0
    %1994 = vmatpush1.msra.mxu0 0.0
    %1995 = vmatprep.subr.mxu0 0.0
    %1996 = vmatpush1.msra.mxu0 0.0
    %1997 = vmatprep.subr.mxu0 0.0
    %1998 = vmatpush1.msra.mxu0 0.0
    %1999 = vmatprep.subr.mxu0 0.0
    %2000 = vmatpush1.msra.mxu0 0.0
    %2001 = vmatprep.subr.mxu0 0.0
    %2002 = vmatpush1.msra.mxu0 0.0
    %2003 = vmatprep.subr.mxu0 0.0
    %2004 = vmatpush1.msra.mxu0 0.0
    %2005 = vmatprep.subr.mxu0 0.0
    %2006 = vmatpush1.msra.mxu0 0.0
    %2007 = vmatprep.subr.mxu0 0.0
    %2008 = vmatpush1.msra.mxu0 0.0
    %2009 = vmatprep.subr.mxu0 0.0
    %2010 = vmatpush1.msra.mxu0 0.0
    %2011 = vmatprep.subr.mxu0 0.0
    %2012 = vmatpush1.msra.mxu0 0.0
    %2013 = vmatprep.subr.mxu0 0.0
    %2014 = vmatpush1.msra.mxu0 0.0
    %2015 = vmatprep.subr.mxu0 0.0
    %2016 = vmatpush1.msra.mxu0 0.0
    %2017 = vmatprep.subr.mxu0 0.0
    %2018 = vmatpush1.msra.mxu0 0.0
    %2019 = vmatprep.subr.mxu0 0.0
    %2020 = vmatpush1.msra.mxu0 0.0
    %2021 = vmatprep.subr.mxu0 0.0
    %2022 = vmatpush1.msra.mxu0 0.0
    %2023 = vmatprep.subr.mxu0 0.0
    %2024 = vmatpush1.msra.mxu0 0.0
    %2025 = vmatprep.subr.mxu0 0.0
    %2026 = vmatpush1.msra.mxu0 0.0
    %2027 = vmatprep.subr.mxu0 0.0
    %2028 = vmatpush1.msra.mxu0 0.0
    %2029 = vmatprep.subr.mxu0 0.0
    %2030 = vmatpush1.msra.mxu0 0.0
    %2031 = vmatprep.subr.mxu0 0.0
    %2032 = vmatpush1.msra.mxu0 0.0
    %2033 = vmatprep.subr.mxu0 0.0
    %2034 = vmatpush1.msra.mxu0 0.0
    %2035 = vmatprep.mubr.f32.mxu0 0.0
    %2036 = vmatmul.mubr.f32.gmra.mrb[0].mxu0 %v1969
    %v2037 = vpop.f32.mrb[0].mxu0
    %v2038 = vadd.f32 %v1965, %v2037
    %v2039 = vpop.f32.mrb[0].mxu0
    %2040 = vdwg.mxu0
    %v2041 = vmul.f32 %v2038, 0.5
    %v2042 = vtanh.pop %v2041
    %v2043 = vmul.f32 %v2042, 0.5
    %v2044 = vadd.f32 %v2043, 0.5
    %2045 = vst [vmem:[%s8] sm:$0xff] %v2044
  $region41: #{fall_lstm_forward.1} parent=0 // pred_fallthru
    _
  // Predicated region
  $region42: #{fall_lstm_forward.1} parent=0 // pred_check
    _
  $region43: #{fall_lstm_forward.1} parent=0 // pred_check_branch
    %2047 = sbr.rel (0) target = $region45
  $region44: #{fall_lstm_forward.1} parent=0 // pred_region
    _
  $region45: #{fall_lstm_forward.1} parent=0 // pred_fallthru
    _
  // Predicated region
  $region46: #{fall_lstm_forward.1} parent=0 // pred_check
    _
  $region47: #{fall_lstm_forward.1} parent=0 // pred_check_branch
    %2049 = sbr.rel (0) target = $region49
  $region48: #{fall_lstm_forward.1} parent=0 // pred_region
    _
  $region49: #{fall_lstm_forward.1} parent=0 // pred_fallthru
    _

</llo_original>
